<compile_context>
chip_gen: v6e
topology: v6e:2x2x1
jax: 0.10.0
libtpu: 0.0.40
codegen_flags: <defaults>
</compile_context>

<pallas_src>
import math

import jax
import jax.numpy as jnp
from jax.experimental import pallas as pl
from jax.experimental.pallas import tpu as pltpu

_LOG_EPS = math.log(1e-8)  # torch.where(new_s > 0, 1.0, 1e-8), in log-space


def _ac_evaluate_kernel(x_ref, w1_ref, w2_ref, w3_ref, bias_ref, out_ref):
    s_dim = w1_ref.shape[0]                   # S
    h2w = w2_ref.shape[0]                     # 2H
    a1 = w3_ref.shape[1]                      # A + 1
    a = a1 - 1
    tb = x_ref.shape[0]

    x = x_ref[:, :s_dim]                                 # [TB, S]  state
    act = x_ref[:, s_dim:s_dim + 1].astype(jnp.int32)    # [TB, 1]  action ids
    bias = bias_ref[...]                                 # [3, 2H + A]

    # ---- fused layer 1: [w1 | wc1 | odd-column selector] --------------------
    y1 = jnp.dot(x, w1_ref[...], preferred_element_type=jnp.float32) + bias[0:1, :]
    h1 = jnp.tanh(y1[:, :h2w])                # actor(:H) + critic(H:2H) hidden 1
    new_s = y1[:, h2w:h2w + a]                # == state.reshape(B, A, 2)[:, :, 1]

    # ---- fused layer 2 (block-diagonal) --------------------------------------
    h2 = jnp.tanh(jnp.dot(h1, w2_ref[...], preferred_element_type=jnp.float32)
                  + bias[1:2, :h2w])

    # ---- fused head: [actor logits | critic value] ---------------------------
    head = jnp.dot(h2, w3_ref[...], preferred_element_type=jnp.float32) + bias[2:3, :a1]
    logits = head[:, :a]
    value = head[:, a:a1]                     # [TB, 1]

    # ---- masked Categorical, log-space (softmax(probs)*mask renormalized) ----
    log_mask = jnp.where(new_s > 0, jnp.float32(0.0), jnp.float32(_LOG_EPS))
    z = logits + log_mask
    m = jnp.max(z, axis=-1, keepdims=True)
    e = jnp.exp(z - m)
    lse = m + jnp.log(jnp.sum(e, axis=-1, keepdims=True))
    logp_all = z - lse                        # finite everywhere (mask 1e-8, not 0)
    p = jnp.exp(logp_all)

    col = jax.lax.broadcasted_iota(jnp.int32, logp_all.shape, 1)
    logp = jnp.sum(jnp.where(col == act, logp_all, 0.0), axis=-1, keepdims=True)
    ent = -jnp.sum(p * logp_all, axis=-1, keepdims=True)

    # ---- lane-dense writeback -------------------------------------------------
    # Pack results into lanes 0..2 of a (TB, 128) slab, transpose on the XLU
    # (fully tile-aligned shape), store the first 8 rows -> output is [8, TB]
    # with unmasked full-lane stores.
    ocol = jax.lax.broadcasted_iota(jnp.int32, (tb, 128), 1)
    packed = jnp.where(ocol == 0, logp,
             jnp.where(ocol == 1, value,
             jnp.where(ocol == 2, ent, jnp.float32(0.0))))
    out_ref[...] = jnp.transpose(packed)[:8, :]


def _round_up(x, m):
    return ((x + m - 1) // m) * m


def _choose_block_b(B, *, lane=128, max_tb=1024, target_steps=8):
    """Pick a batch tile (multiple of 128) giving >=2 grid steps when B > 128."""
    bp = _round_up(B, lane)
    if bp <= lane:
        return lane                                   # single step is unavoidable
    tb = _round_up(-(-bp // target_steps), lane)      # aim for ~target_steps steps
    half = max(lane, (bp // 2) // lane * lane)        # guarantees >= 2 steps
    return max(lane, min(tb, max_tb, half))


def fuse_params(params, action_dim):
    """Pack actor/critic weights into block-diagonal fused slabs + one bias slab."""
    w1, b1 = params["w1"], params["b1"]
    w2, b2 = params["w2"], params["b2"]
    w3, b3 = params["w3"], params["b3"]
    wc1, bc1 = params["wc1"], params["bc1"]
    wc2, bc2 = params["wc2"], params["bc2"]
    wc3, bc3 = params["wc3"], params["bc3"]

    s_dim, h = w1.shape
    a = action_dim
    assert s_dim == 2 * a, "module requires state_dim == 2 * action_dim"
    wide = 2 * h + a

    # layer 1: [w1 | wc1 | selector picking state[:, 1::2]]
    w1f = jnp.zeros((s_dim, wide), jnp.float32)
    w1f = w1f.at[:, :h].set(w1).at[:, h:2 * h].set(wc1)
    w1f = w1f.at[2 * jnp.arange(a) + 1, 2 * h + jnp.arange(a)].set(1.0)

    # layer 2: block-diagonal [w2, 0; 0, wc2]
    w2f = jnp.zeros((2 * h, 2 * h), jnp.float32)
    w2f = w2f.at[:h, :h].set(w2).at[h:, h:].set(wc2)

    # head: [w3 -> logits | wc3 -> value]
    w3f = jnp.zeros((2 * h, a + 1), jnp.float32)
    w3f = w3f.at[:h, :a].set(w3).at[h:, a:].set(wc3)

    # all biases in one slab [3, 2H + A]
    bias = jnp.zeros((3, wide), jnp.float32)
    bias = bias.at[0, :h].set(b1[0]).at[0, h:2 * h].set(bc1[0])
    bias = bias.at[1, :h].set(b2[0]).at[1, h:2 * h].set(bc2[0])
    bias = bias.at[2, :a].set(b3[0]).at[2, a:a + 1].set(bc3[0])
    return dict(w1f=w1f, w2f=w2f, w3f=w3f, bias=bias, hidden=h, action_dim=a)


def actor_critic_evaluate(state, action, params, *, block_b=None):
    """Discrete-action ActorCritic.evaluate().

    state:  [B, state_dim] float32   (state_dim == 2 * action_dim)
    action: [B] int32
    returns (action_logprobs [B], state_values [B, 1], dist_entropy [B])
    """
    B, s_dim = state.shape
    fused = fuse_params(params, params["w3"].shape[1])
    h = fused["hidden"]
    a = fused["action_dim"]
    wide = 2 * h + a

    tb = _choose_block_b(B) if block_b is None else _round_up(max(block_b, 128), 128)
    bp = _round_up(B, tb)
    grid = (bp // tb,)

    # one merged, padded input slab: [state | action-id as f32]  ->  [bp, S+1]
    # (action ids < 2^24 are exactly representable in f32)
    slab = jnp.zeros((bp, s_dim + 1), jnp.float32)
    slab = slab.at[:B, :s_dim].set(state.astype(jnp.float32))
    slab = slab.at[:B, s_dim].set(action.astype(jnp.float32))

    flops = 2 * bp * (s_dim * wide + (2 * h) * (2 * h) + (2 * h) * (a + 1))
    transcendentals = bp * (4 * h + 2 * a + 1)
    bytes_accessed = (bp * (s_dim + 1 + 8) * 4
                      + 4 * (s_dim * wide + 4 * h * h + 2 * h * (a + 1) + 3 * wide))

    out = pl.pallas_call(
        _ac_evaluate_kernel,
        out_shape=jax.ShapeDtypeStruct((8, bp), jnp.float32),
        grid=grid,
        in_specs=[
            pl.BlockSpec((tb, s_dim + 1), lambda i: (i, 0)),   # [state|action] tile
            pl.BlockSpec((s_dim, wide), lambda i: (0, 0)),     # fused W1 (VMEM-resident)
            pl.BlockSpec((2 * h, 2 * h), lambda i: (0, 0)),    # fused W2
            pl.BlockSpec((2 * h, a + 1), lambda i: (0, 0)),    # fused W3
            pl.BlockSpec((3, wide), lambda i: (0, 0)),         # packed biases
        ],
        out_specs=pl.BlockSpec((8, tb), lambda i: (0, i)),     # lane-dense [8, B]
        compiler_params=pltpu.CompilerParams(
            dimension_semantics=("parallel",),
            vmem_limit_bytes=32 * 1024 * 1024),
        cost_estimate=pl.CostEstimate(flops=flops,
                                      transcendentals=transcendentals,
                                      bytes_accessed=bytes_accessed),
    )(slab, fused["w1f"], fused["w2f"], fused["w3f"], fused["bias"])

    logp = out[0, :B]
    values = out[1, :B][:, None]
    ent = out[2, :B]
    return logp, values, ent


def _linear_params(key, fan_in, fan_out):
    # torch.nn.Linear default init: U(-1/sqrt(fan_in), 1/sqrt(fan_in))
    kw, kb = jax.random.split(key)
    bound = 1.0 / math.sqrt(fan_in)
    w = jax.random.uniform(kw, (fan_in, fan_out), jnp.float32, -bound, bound)
    b = jax.random.uniform(kb, (1, fan_out), jnp.float32, -bound, bound)
    return w, b


def init_params(key, state_dim, action_dim, hidden_units):
    keys = jax.random.split(key, 6)
    w1, b1 = _linear_params(keys[0], state_dim, hidden_units)
    w2, b2 = _linear_params(keys[1], hidden_units, hidden_units)
    w3, b3 = _linear_params(keys[2], hidden_units, action_dim)
    wc1, bc1 = _linear_params(keys[3], state_dim, hidden_units)
    wc2, bc2 = _linear_params(keys[4], hidden_units, hidden_units)
    wc3, bc3 = _linear_params(keys[5], hidden_units, 1)
    return dict(w1=w1, b1=b1, w2=w2, b2=b2, w3=w3, b3=b3,
                wc1=wc1, bc1=bc1, wc2=wc2, bc2=bc2, wc3=wc3, bc3=bc3)


def _reference_evaluate(state, action, params):
    # Pure-JAX mirror of the module's math (softmax -> mask -> renormalized
    # Categorical).  Uses default matmul precision, i.e. the same bf16-input
    # MXU passes the Pallas kernel uses, so the comparison is tight.
    def mlp(x, w1, b1, w2, b2, w3, b3):
        hh = jnp.tanh(jnp.dot(x, w1) + b1)
        hh = jnp.tanh(jnp.dot(hh, w2) + b2)
        return jnp.dot(hh, w3) + b3

    logits = mlp(state, params["w1"], params["b1"], params["w2"], params["b2"],
                 params["w3"], params["b3"])
    probs = jax.nn.softmax(logits, axis=-1)
    B = state.shape[0]
    A = params["w3"].shape[1]
    new_s = state.reshape(B, A, 2)[:, :, 1]
    mask = jnp.where(new_s > 0, 1.0, 1e-8)
    ap = probs * mask
    p = ap / jnp.sum(ap, axis=-1, keepdims=True)
    logp_all = jnp.log(p)
    logp = jnp.take_along_axis(logp_all, action[:, None], axis=-1)[:, 0]
    ent = -jnp.sum(p * logp_all, axis=-1)
    values = mlp(state, params["wc1"], params["bc1"], params["wc2"], params["bc2"],
                 params["wc3"], params["bc3"])
    return logp, values, ent


if __name__ == "__main__":
    # TODO(synk): continuous-action branch (MultivariateNormal) and stochastic
    #             act()/sampling are not kernelized; only the deterministic
    #             discrete evaluate() path runs in the Pallas kernel.
    B = 256
    action_dim = 8
    state_dim = 2 * action_dim   # required by the module's masking reshape
    hidden_units = 64

    key = jax.random.PRNGKey(0)
    kp, ks, ka = jax.random.split(key, 3)
    params = init_params(kp, state_dim, action_dim, hidden_units)
    state = jax.random.normal(ks, (B, state_dim), jnp.float32)
    action = jax.random.randint(ka, (B,), 0, action_dim, jnp.int32)

    # auto tiling -> tb=128, grid=(2,) at this batch (>=2 steps for v7x megacore)
    logp, values, ent = actor_critic_evaluate(state, action, params)
    jax.block_until_ready((logp, values, ent))

    # sanity check against a pure-JAX reference of the module
    r_logp, r_values, r_ent = _reference_evaluate(state, action, params)
    assert jnp.allclose(logp, r_logp, atol=2e-3, rtol=2e-3)
    assert jnp.allclose(values, r_values, atol=2e-3, rtol=2e-3)
    assert jnp.allclose(ent, r_ent, atol=2e-3, rtol=2e-3)

    print("KERNEL_OK")
</pallas_src>

<mosaic_0001>
module attributes {stable_mosaic.version = 11 : i64} {
  func.func @_ac_evaluate_kernel(%arg0: i32, %arg1: memref<128x17xf32, #tpu.memory_space<vmem>>, %arg2: memref<16x136xf32, #tpu.memory_space<vmem>>, %arg3: memref<128x128xf32, #tpu.memory_space<vmem>>, %arg4: memref<128x9xf32, #tpu.memory_space<vmem>>, %arg5: memref<3x136xf32, #tpu.memory_space<vmem>>, %arg6: memref<8x128xf32, #tpu.memory_space<vmem>>) attributes {dimension_semantics = [#tpu.dimension_semantics<parallel>], iteration_bounds = array<i64: 2>, scalar_prefetch = 0 : i64, scratch_operands = 0 : i64, tpu.core_type = #tpu.core_type<tc>, window_params = [{transform_indices = @transform_0, window_bounds = array<i64: 128, 17>}, {pipeline_mode = #tpu.pipeline_mode<synchronous>, transform_indices = @transform_1, window_bounds = array<i64: 16, 136>}, {pipeline_mode = #tpu.pipeline_mode<synchronous>, transform_indices = @transform_2, window_bounds = array<i64: 128, 128>}, {pipeline_mode = #tpu.pipeline_mode<synchronous>, transform_indices = @transform_3, window_bounds = array<i64: 128, 9>}, {pipeline_mode = #tpu.pipeline_mode<synchronous>, transform_indices = @transform_4, window_bounds = array<i64: 3, 136>}, {transform_indices = @transform_5, window_bounds = array<i64: 8, 128>}]} {
    %c0 = arith.constant 0 : index
    %c0_0 = arith.constant 0 : index
    %0 = vector.load %arg1[%c0, %c0_0] : memref<128x17xf32, #tpu.memory_space<vmem>>, vector<128x16xf32>
    %c0_1 = arith.constant 0 : index
    %c16 = arith.constant 16 : index
    %1 = vector.load %arg1[%c0_1, %c16] : memref<128x17xf32, #tpu.memory_space<vmem>>, vector<128x1xf32>
    %2 = arith.fptosi %1 : vector<128x1xf32> to vector<128x1xi32>
    %c0_2 = arith.constant 0 : index
    %c0_3 = arith.constant 0 : index
    %3 = vector.load %arg5[%c0_2, %c0_3] : memref<3x136xf32, #tpu.memory_space<vmem>>, vector<3x136xf32>
    %c0_4 = arith.constant 0 : index
    %c0_5 = arith.constant 0 : index
    %4 = vector.load %arg2[%c0_4, %c0_5] : memref<16x136xf32, #tpu.memory_space<vmem>>, vector<16x136xf32>
    %cst = arith.constant dense<0.000000e+00> : vector<128x136xf32>
    %5 = tpu.matmul %0, %4, %cst {dimension_numbers = #tpu.dot_dimension_numbers<[1], [0], [0], [1], [0, 0, 1, 1], [], []>} : vector<128x16xf32>, vector<16x136xf32>, vector<128x136xf32> -> vector<128x136xf32>
    %6 = vector.extract_strided_slice %3 {offsets = [0, 0], sizes = [1, 136], strides = [1, 1]} : vector<3x136xf32> to vector<1x136xf32>
    %7 = vector.broadcast %6 : vector<1x136xf32> to vector<128x136xf32>
    %8 = arith.addf %5, %7 : vector<128x136xf32>
    %9 = vector.extract_strided_slice %8 {offsets = [0, 0], sizes = [128, 128], strides = [1, 1]} : vector<128x136xf32> to vector<128x128xf32>
    %10 = math.tanh %9 : vector<128x128xf32>
    %11 = vector.extract_strided_slice %8 {offsets = [0, 128], sizes = [128, 8], strides = [1, 1]} : vector<128x136xf32> to vector<128x8xf32>
    %c0_6 = arith.constant 0 : index
    %c0_7 = arith.constant 0 : index
    %12 = vector.load %arg3[%c0_6, %c0_7] : memref<128x128xf32, #tpu.memory_space<vmem>>, vector<128x128xf32>
    %cst_8 = arith.constant dense<0.000000e+00> : vector<128x128xf32>
    %13 = tpu.matmul %10, %12, %cst_8 {dimension_numbers = #tpu.dot_dimension_numbers<[1], [0], [0], [1], [0, 0, 1, 1], [], []>} : vector<128x128xf32>, vector<128x128xf32>, vector<128x128xf32> -> vector<128x128xf32>
    %14 = vector.extract_strided_slice %3 {offsets = [1, 0], sizes = [1, 128], strides = [1, 1]} : vector<3x136xf32> to vector<1x128xf32>
    %15 = vector.broadcast %14 : vector<1x128xf32> to vector<128x128xf32>
    %16 = arith.addf %13, %15 : vector<128x128xf32>
    %17 = math.tanh %16 : vector<128x128xf32>
    %c0_9 = arith.constant 0 : index
    %c0_10 = arith.constant 0 : index
    %18 = vector.load %arg4[%c0_9, %c0_10] : memref<128x9xf32, #tpu.memory_space<vmem>>, vector<128x9xf32>
    %cst_11 = arith.constant dense<0.000000e+00> : vector<128x9xf32>
    %19 = tpu.matmul %17, %18, %cst_11 {dimension_numbers = #tpu.dot_dimension_numbers<[1], [0], [0], [1], [0, 0, 1, 1], [], []>} : vector<128x128xf32>, vector<128x9xf32>, vector<128x9xf32> -> vector<128x9xf32>
    %20 = vector.extract_strided_slice %3 {offsets = [2, 0], sizes = [1, 9], strides = [1, 1]} : vector<3x136xf32> to vector<1x9xf32>
    %21 = vector.broadcast %20 : vector<1x9xf32> to vector<128x9xf32>
    %22 = arith.addf %19, %21 : vector<128x9xf32>
    %23 = vector.extract_strided_slice %22 {offsets = [0, 0], sizes = [128, 8], strides = [1, 1]} : vector<128x9xf32> to vector<128x8xf32>
    %24 = vector.extract_strided_slice %22 {offsets = [0, 8], sizes = [128, 1], strides = [1, 1]} : vector<128x9xf32> to vector<128x1xf32>
    %cst_12 = arith.constant 0.000000e+00 : f32
    %25 = vector.broadcast %cst_12 : f32 to vector<128x8xf32>
    %26 = arith.cmpf ogt, %11, %25 : vector<128x8xf32>
    %cst_13 = arith.constant 0.000000e+00 : f32
    %cst_14 = arith.constant -18.420681 : f32
    %27 = vector.broadcast %cst_13 : f32 to vector<128x8xf32>
    %28 = vector.broadcast %cst_14 : f32 to vector<128x8xf32>
    %29 = arith.select %26, %27, %28 : vector<128x8xi1>, vector<128x8xf32>
    %30 = arith.addf %23, %29 : vector<128x8xf32>
    %cst_15 = arith.constant dense<0xFF800000> : vector<128xf32>
    %31 = vector.multi_reduction <maximumf>, %30, %cst_15 [1] : vector<128x8xf32> to vector<128xf32>
    %32 = vector.shape_cast %31 : vector<128xf32> to vector<128x1xf32>
    %33 = vector.broadcast %32 : vector<128x1xf32> to vector<128x8xf32>
    %34 = arith.subf %30, %33 : vector<128x8xf32>
    %35 = math.exp %34 : vector<128x8xf32>
    %cst_16 = arith.constant dense<0.000000e+00> : vector<128xf32>
    %36 = vector.multi_reduction <add>, %35, %cst_16 [1] : vector<128x8xf32> to vector<128xf32>
    %37 = vector.shape_cast %36 : vector<128xf32> to vector<128x1xf32>
    %38 = math.log %37 : vector<128x1xf32>
    %39 = arith.addf %32, %38 : vector<128x1xf32>
    %40 = vector.broadcast %39 : vector<128x1xf32> to vector<128x8xf32>
    %41 = arith.subf %30, %40 : vector<128x8xf32>
    %42 = math.exp %41 : vector<128x8xf32>
    %43 = tpu.iota {dimensions = array<i32: 1>} : vector<128x8xi32>
    %44 = vector.broadcast %2 : vector<128x1xi32> to vector<128x8xi32>
    %45 = arith.cmpi eq, %43, %44 : vector<128x8xi32>
    %cst_17 = arith.constant 0.000000e+00 : f32
    %46 = vector.broadcast %cst_17 : f32 to vector<128x8xf32>
    %47 = arith.select %45, %41, %46 : vector<128x8xi1>, vector<128x8xf32>
    %cst_18 = arith.constant dense<0.000000e+00> : vector<128xf32>
    %48 = vector.multi_reduction <add>, %47, %cst_18 [1] : vector<128x8xf32> to vector<128xf32>
    %49 = vector.shape_cast %48 : vector<128xf32> to vector<128x1xf32>
    %50 = arith.mulf %42, %41 : vector<128x8xf32>
    %cst_19 = arith.constant dense<0.000000e+00> : vector<128xf32>
    %51 = vector.multi_reduction <add>, %50, %cst_19 [1] : vector<128x8xf32> to vector<128xf32>
    %52 = vector.shape_cast %51 : vector<128xf32> to vector<128x1xf32>
    %cst_20 = arith.constant 0.000000e+00 : f32
    %53 = vector.broadcast %cst_20 : f32 to vector<128x1xf32>
    %54 = arith.subf %53, %52 : vector<128x1xf32>
    %55 = tpu.iota {dimensions = array<i32: 1>} : vector<128x128xi32>
    %c0_i32 = arith.constant 0 : i32
    %56 = vector.broadcast %c0_i32 : i32 to vector<128x128xi32>
    %57 = arith.cmpi eq, %55, %56 : vector<128x128xi32>
    %c1_i32 = arith.constant 1 : i32
    %58 = vector.broadcast %c1_i32 : i32 to vector<128x128xi32>
    %59 = arith.cmpi eq, %55, %58 : vector<128x128xi32>
    %c2_i32 = arith.constant 2 : i32
    %60 = vector.broadcast %c2_i32 : i32 to vector<128x128xi32>
    %61 = arith.cmpi eq, %55, %60 : vector<128x128xi32>
    %cst_21 = arith.constant 0.000000e+00 : f32
    %62 = vector.shape_cast %54 : vector<128x1xf32> to vector<128x1xf32>
    %63 = vector.broadcast %62 : vector<128x1xf32> to vector<128x128xf32>
    %64 = vector.broadcast %cst_21 : f32 to vector<128x128xf32>
    %65 = arith.select %61, %63, %64 : vector<128x128xi1>, vector<128x128xf32>
    %66 = vector.shape_cast %24 : vector<128x1xf32> to vector<128x1xf32>
    %67 = vector.broadcast %66 : vector<128x1xf32> to vector<128x128xf32>
    %68 = arith.select %59, %67, %65 : vector<128x128xi1>, vector<128x128xf32>
    %69 = vector.shape_cast %49 : vector<128x1xf32> to vector<128x1xf32>
    %70 = vector.broadcast %69 : vector<128x1xf32> to vector<128x128xf32>
    %71 = arith.select %57, %70, %68 : vector<128x128xi1>, vector<128x128xf32>
    %72 = tpu.transpose %71, [1, 0] : vector<128x128xf32> -> vector<128x128xf32>
    %73 = vector.extract_strided_slice %72 {offsets = [0, 0], sizes = [8, 128], strides = [1, 1]} : vector<128x128xf32> to vector<8x128xf32>
    %c0_22 = arith.constant 0 : index
    %c0_23 = arith.constant 0 : index
    %74 = vector.load %arg6[%c0_22, %c0_23] : memref<8x128xf32, #tpu.memory_space<vmem>>, vector<8x128xf32>
    tpu.vector_store %arg6[%c0_22, %c0_23], %73 {strides = array<i32>} : memref<8x128xf32, #tpu.memory_space<vmem>>, vector<8x128xf32>,
    return
  }
  func.func @transform_0(%arg0: i32) -> (i32, i32) {
    %c0_i32 = arith.constant 0 : i32
    %c0_i32_0 = arith.constant 0 : i32
    return %arg0, %c0_i32 : i32, i32
  }
  func.func @transform_1(%arg0: i32) -> (i32, i32) {
    %c0_i32 = arith.constant 0 : i32
    %c0_i32_0 = arith.constant 0 : i32
    %c0_i32_1 = arith.constant 0 : i32
    return %c0_i32, %c0_i32_0 : i32, i32
  }
  func.func @transform_2(%arg0: i32) -> (i32, i32) {
    %c0_i32 = arith.constant 0 : i32
    %c0_i32_0 = arith.constant 0 : i32
    %c0_i32_1 = arith.constant 0 : i32
    return %c0_i32, %c0_i32_0 : i32, i32
  }
  func.func @transform_3(%arg0: i32) -> (i32, i32) {
    %c0_i32 = arith.constant 0 : i32
    %c0_i32_0 = arith.constant 0 : i32
    %c0_i32_1 = arith.constant 0 : i32
    return %c0_i32, %c0_i32_0 : i32, i32
  }
  func.func @transform_4(%arg0: i32) -> (i32, i32) {
    %c0_i32 = arith.constant 0 : i32
    %c0_i32_0 = arith.constant 0 : i32
    %c0_i32_1 = arith.constant 0 : i32
    return %c0_i32, %c0_i32_0 : i32, i32
  }
  func.func @transform_5(%arg0: i32) -> (i32, i32) {
    %c0_i32 = arith.constant 0 : i32
    %c0_i32_0 = arith.constant 0 : i32
    return %c0_i32, %arg0 : i32, i32
  }
}

</mosaic_0001>

<llo_original>
// kernel: tpu_custom_call.1
$region0: #{tpu_custom_call.1}
  #allocation0 [shape = 'u32[]', space=smem, size = 0x4, offset = 0x4, fixed_abs, tag = 'smem constant byte address 0x4 - core index']
  #allocation1 [shape = 'u32[144,128]{1,0:T(1,128)}', space=vmem, size = 0x12000, scoped, tag = 'internal scratch']
  %s0 = inlined_call_operand.vmem [shape: f32[256,17], index: 0, kind: input, shape index: {}]
  %s1 = inlined_call_operand.vmem [shape: f32[16,136], index: 1, kind: input, shape index: {}]
  %s2 = inlined_call_operand.vmem [shape: f32[128,128], index: 2, kind: input, shape index: {}]
  %s3 = inlined_call_operand.vmem [shape: f32[128,9], index: 3, kind: input, shape index: {}]
  %s4 = inlined_call_operand.vmem [shape: f32[3,136], index: 4, kind: input, shape index: {}]
  %s5 = inlined_call_operand.hbm [shape: f32[8,256], index: 5, kind: output, shape index: {}]
  %s6 = sld [smem:[#allocation0]]
  $region53: #{tpu_custom_call.1} parent=0
    _
  %s8 = ssub.s32 1, %s6
  %s9 = scalar_select 0, %s8, %s6
  $region1: #{tpu_custom_call.1} parent=0
    #allocation2 [shape = 'u8[8192]{0}', space=vmem, size = 0x2000, scoped, tag = 'output window, operand 0']
    #allocation3 [shape = 's32[2]{0}', space=sflag, size = 0x8, scoped, tag = 'scoped memory for tpu_custom_call.1']
    %10 = vsyncpa [#allocation3], 0
    %s11 = scalar_lea.sflag [#allocation3], 1
    %12 = vsyncpa %s11, 0
    loop: start=0, step=1, limit=4
    $region2: #{tpu_custom_call.1} parent=1 // loop_pre_header
      _
    $region3: #{tpu_custom_call.1} parent=1 // loop_header
      %s14 = sphi 0, %s18
      %p15 = scmp.ge.s32.totalorder %s14, 4
      %s24 = sphi 0, %s26
      %s27 = sphi 0, %s24
      %s28 = sphi 0, %s27
      %s44 = sphi 0, %s28
      %s48 = sphi 0, %s48
      %s50 = sphi 0, %s48
      %s51 = sphi 0, %s50
      %s65 = sphi 0, %s51
      %s69 = sphi 0, %s69
      %s71 = sphi 0, %s69
      %s72 = sphi 0, %s71
      %s86 = sphi 0, %s72
      %s90 = sphi 0, %s90
      %s92 = sphi 0, %s90
      %s93 = sphi 0, %s92
      %s107 = sphi 0, %s93
      %s111 = sphi 0, %s111
      %s113 = sphi 0, %s111
      %s114 = sphi 0, %s113
      %s128 = sphi 0, %s114
      %s134 = sphi 0, %s136
      %s137 = sphi 0, %s134
      %s138 = sphi 0, %s137
      %s154 = sphi 0, %s138
    $region4: #{tpu_custom_call.1} parent=1 // loop_header_branch
      %17 = sbr.rel (%p15) target = $region8
    $region5: #{tpu_custom_call.1} parent=1 // loop_body
      %s19 = ssub.s32 %s14, 1
      %s20 = ssub.s32 %s14, 2
      %s21 = sadd.s32 %s14, 1
      %s22 = ssub.s32 %s14, %s21
      %p23 = scmp.eq.s32.totalorder %s22, 0
      %s25 = sadd.s32 %s24, 1
      %s26 = scalar_select %p23, %s24, %s25
      %p29 = pneg %p23
      %p30 = scmp.eq.s32.totalorder %s14, 1
      %p31 = por %p29, %p30
      %p32 = scmp.ne.s32.totalorder %s24, %s27
      %p33 = scmp.eq.s32.totalorder %s14, 0
      %p34 = por %p32, %p33
      %p35 = scmp.ne.s32.totalorder %s24, %s27
      %p36 = scmp.eq.s32.totalorder %s19, 1
      %p37 = por %p35, %p36
      %p38 = scmp.ne.s32.totalorder %s27, %s28
      %p39 = scmp.eq.s32.totalorder %s19, 0
      %p40 = por %p38, %p39
      %p41 = scmp.ne.s32.totalorder %s27, %s28
      %p42 = scmp.eq.s32.totalorder %s20, 1
      %p43 = por %p41, %p42
      %p45 = scmp.ne.s32.totalorder %s28, %s44
      %p46 = scmp.eq.s32.totalorder %s20, 0
      %p47 = por %p45, %p46
      %s49 = sadd.s32 %s48, 1
      %p52 = scmp.eq.s32.totalorder %s14, 1
      %p53 = scmp.ne.s32.totalorder %s48, %s50
      %p54 = scmp.eq.s32.totalorder %s14, 0
      %p55 = por %p53, %p54
      %p56 = scmp.ne.s32.totalorder %s48, %s50
      %p57 = scmp.eq.s32.totalorder %s19, 1
      %p58 = por %p56, %p57
      %p59 = scmp.ne.s32.totalorder %s50, %s51
      %p60 = scmp.eq.s32.totalorder %s19, 0
      %p61 = por %p59, %p60
      %p62 = scmp.ne.s32.totalorder %s50, %s51
      %p63 = scmp.eq.s32.totalorder %s20, 1
      %p64 = por %p62, %p63
      %p66 = scmp.ne.s32.totalorder %s51, %s65
      %p67 = scmp.eq.s32.totalorder %s20, 0
      %p68 = por %p66, %p67
      %s70 = sadd.s32 %s69, 1
      %p73 = scmp.eq.s32.totalorder %s14, 1
      %p74 = scmp.ne.s32.totalorder %s69, %s71
      %p75 = scmp.eq.s32.totalorder %s14, 0
      %p76 = por %p74, %p75
      %p77 = scmp.ne.s32.totalorder %s69, %s71
      %p78 = scmp.eq.s32.totalorder %s19, 1
      %p79 = por %p77, %p78
      %p80 = scmp.ne.s32.totalorder %s71, %s72
      %p81 = scmp.eq.s32.totalorder %s19, 0
      %p82 = por %p80, %p81
      %p83 = scmp.ne.s32.totalorder %s71, %s72
      %p84 = scmp.eq.s32.totalorder %s20, 1
      %p85 = por %p83, %p84
      %p87 = scmp.ne.s32.totalorder %s72, %s86
      %p88 = scmp.eq.s32.totalorder %s20, 0
      %p89 = por %p87, %p88
      %s91 = sadd.s32 %s90, 1
      %p94 = scmp.eq.s32.totalorder %s14, 1
      %p95 = scmp.ne.s32.totalorder %s90, %s92
      %p96 = scmp.eq.s32.totalorder %s14, 0
      %p97 = por %p95, %p96
      %p98 = scmp.ne.s32.totalorder %s90, %s92
      %p99 = scmp.eq.s32.totalorder %s19, 1
      %p100 = por %p98, %p99
      %p101 = scmp.ne.s32.totalorder %s92, %s93
      %p102 = scmp.eq.s32.totalorder %s19, 0
      %p103 = por %p101, %p102
      %p104 = scmp.ne.s32.totalorder %s92, %s93
      %p105 = scmp.eq.s32.totalorder %s20, 1
      %p106 = por %p104, %p105
      %p108 = scmp.ne.s32.totalorder %s93, %s107
      %p109 = scmp.eq.s32.totalorder %s20, 0
      %p110 = por %p108, %p109
      %s112 = sadd.s32 %s111, 1
      %p115 = scmp.eq.s32.totalorder %s14, 1
      %p116 = scmp.ne.s32.totalorder %s111, %s113
      %p117 = scmp.eq.s32.totalorder %s14, 0
      %p118 = por %p116, %p117
      %p119 = scmp.ne.s32.totalorder %s111, %s113
      %p120 = scmp.eq.s32.totalorder %s19, 1
      %p121 = por %p119, %p120
      %p122 = scmp.ne.s32.totalorder %s113, %s114
      %p123 = scmp.eq.s32.totalorder %s19, 0
      %p124 = por %p122, %p123
      %p125 = scmp.ne.s32.totalorder %s113, %s114
      %p126 = scmp.eq.s32.totalorder %s20, 1
      %p127 = por %p125, %p126
      %p129 = scmp.ne.s32.totalorder %s114, %s128
      %p130 = scmp.eq.s32.totalorder %s20, 0
      %p131 = por %p129, %p130
      %s132 = ssub.s32 %s14, %s21
      %p133 = scmp.eq.s32.totalorder %s132, 0
      %s135 = sadd.s32 %s134, 1
      %s136 = scalar_select %p133, %s134, %s135
      %p139 = pneg %p133
      %p140 = scmp.eq.s32.totalorder %s14, 1
      %p141 = por %p139, %p140
      %p142 = scmp.ne.s32.totalorder %s134, %s137
      %p143 = scmp.eq.s32.totalorder %s14, 0
      %p144 = por %p142, %p143
      %p145 = scmp.ne.s32.totalorder %s134, %s137
      %p146 = scmp.eq.s32.totalorder %s19, 1
      %p147 = por %p145, %p146
      %p148 = scmp.ne.s32.totalorder %s137, %s138
      %p149 = scmp.eq.s32.totalorder %s19, 0
      %p150 = por %p148, %p149
      %p151 = scmp.ne.s32.totalorder %s137, %s138
      %p152 = scmp.eq.s32.totalorder %s20, 1
      %p153 = por %p151, %p152
      %p155 = scmp.ne.s32.totalorder %s138, %s154
      %p156 = scmp.eq.s32.totalorder %s20, 0
      %p157 = por %p155, %p156
      %p158 = scmp.le.s32.totalorder 1, %s14
      %p159 = scmp.lt.s32.totalorder %s14, 3
      %p160 = pnand %p158, %p159
      %p161 = pneg %p160
      // Predicated region
      $region9: #{tpu_custom_call.1} parent=5 // pred_check
        _
      $region10: #{tpu_custom_call.1} parent=5 // pred_check_branch
        %163 = sbr.rel (%p160) target = $region12
      $region11: #{tpu_custom_call.1} parent=5 // pred_region
        %s164 = ssub.s32 %s14, 1
        // Predicated region
        $region13: #{tpu_custom_call.1} parent=11 // pred_check
          %p165 = pneg %p61
        $region14: #{tpu_custom_call.1} parent=11 // pred_check_branch
          %167 = sbr.rel (%p165) target = $region16
        $region15: #{tpu_custom_call.1} parent=11 // pred_region
          _
        $region16: #{tpu_custom_call.1} parent=11 // pred_fallthru
          _
        // Predicated region
        $region17: #{tpu_custom_call.1} parent=11 // pred_check
          %p168 = pneg %p82
        $region18: #{tpu_custom_call.1} parent=11 // pred_check_branch
          %170 = sbr.rel (%p168) target = $region20
        $region19: #{tpu_custom_call.1} parent=11 // pred_region
          _
        $region20: #{tpu_custom_call.1} parent=11 // pred_fallthru
          _
        // Predicated region
        $region21: #{tpu_custom_call.1} parent=11 // pred_check
          %p171 = pneg %p103
        $region22: #{tpu_custom_call.1} parent=11 // pred_check_branch
          %173 = sbr.rel (%p171) target = $region24
        $region23: #{tpu_custom_call.1} parent=11 // pred_region
          _
        $region24: #{tpu_custom_call.1} parent=11 // pred_fallthru
          _
        // Predicated region
        $region25: #{tpu_custom_call.1} parent=11 // pred_check
          %p174 = pneg %p124
        $region26: #{tpu_custom_call.1} parent=11 // pred_check_branch
          %176 = sbr.rel (%p174) target = $region28
        $region27: #{tpu_custom_call.1} parent=11 // pred_region
          _
        $region28: #{tpu_custom_call.1} parent=11 // pred_fallthru
          _
      $region12: #{tpu_custom_call.1} parent=5 // pred_fallthru
        _
      %p177 = scmp.lt.s32.totalorder %s14, 2
      // Predicated region
      $region29: #{tpu_custom_call.1} parent=5 // pred_check
        %p178 = pneg %p177
      $region30: #{tpu_custom_call.1} parent=5 // pred_check_branch
        %180 = sbr.rel (%p178) target = $region32
      $region31: #{tpu_custom_call.1} parent=5 // pred_region
        // Predicated region
        $region33: #{tpu_custom_call.1} parent=31 // pred_check
          %p181 = pneg %p34
        $region34: #{tpu_custom_call.1} parent=31 // pred_check_branch
          %183 = sbr.rel (%p181) target = $region36
        $region35: #{tpu_custom_call.1} parent=31 // pred_region
          %s184 = smul.u32 16, %s14
          %p185 = scmp.lt.s32.totalorder %s184, 31
          %s186 = scalar_select %p185, %s184, 31
          %s187 = smul.addr %s186, 8
          %s188 = scalar_lea.vmem %s0, %s187
          %s189 = smul.u32 16, %s14
        $region36: #{tpu_custom_call.1} parent=31 // pred_fallthru
          _
      $region32: #{tpu_custom_call.1} parent=5 // pred_fallthru
        _
      %p190 = scmp.le.s32.totalorder 1, %s14
      %p191 = scmp.lt.s32.totalorder %s14, 3
      %p192 = pnand %p190, %p191
      %p193 = pneg %p192
      // Predicated region
      $region37: #{tpu_custom_call.1} parent=5 // pred_check
        _
      $region38: #{tpu_custom_call.1} parent=5 // pred_check_branch
        %195 = sbr.rel (%p192) target = $region40
      $region39: #{tpu_custom_call.1} parent=5 // pred_region
        %s196 = ssub.s32 %s14, 1
        %s197 = smul.u32 16, %s19
        %p198 = scmp.lt.s32.totalorder %s197, 31
        %s199 = scalar_select %p198, %s197, 31
        %s200 = smul.addr %s199, 8
        %s201 = scalar_lea.vmem %s0, %s200
        %p202 = pneg %p40
        %p203 = pneg %p37
        %p204 = pneg %p61
        %p205 = pneg %p58
        %p206 = pneg %p82
        %p207 = pneg %p79
        %p208 = pneg %p103
        %p209 = pneg %p100
        %p210 = pneg %p124
        %p211 = pneg %p121
        %p212 = pneg %p150
        %p213 = pneg %p147
        %s214 = sand.u32 %s137, 1
        %s215 = scalar_lea.sflag [#allocation3], %s214
        %s216 = sand.u32 %s137, 1
        %s217 = smul.addr %s216, 8
        %s218 = scalar_lea.vmem [#allocation2], %s217
        %s219 = smul.u32 16, %s19
        %p220 = scmp.lt.s32.totalorder %s219, 31
        %s221 = scalar_select %p220, %s219, 31
        %s222 = smul.addr %s221, 8
        %s223 = scalar_lea.vmem %s0, %s222
        %s224 = smul.u32 16, %s19
        %v225 = vld [vmem:[%s223] sm:$0xff]
        %v226 = vld [vmem:[%s223 + $0x8] sm:$0xff]
        %v227 = vld [vmem:[%s223 + $0x10] sm:$0xff]
        %v228 = vld [vmem:[%s223 + $0x18] sm:$0xff]
        %v229 = vld [vmem:[%s223 + $0x20] sm:$0xff]
        %v230 = vld [vmem:[%s223 + $0x28] sm:$0xff]
        %v231 = vld [vmem:[%s223 + $0x30] sm:$0xff]
        %v232 = vld [vmem:[%s223 + $0x38] sm:$0xff]
        %v233 = vld [vmem:[%s223 + $0x40] sm:$0xff]
        %v234 = vld [vmem:[%s223 + $0x48] sm:$0xff]
        %v235 = vld [vmem:[%s223 + $0x50] sm:$0xff]
        %v236 = vld [vmem:[%s223 + $0x58] sm:$0xff]
        %v237 = vld [vmem:[%s223 + $0x60] sm:$0xff]
        %v238 = vld [vmem:[%s223 + $0x68] sm:$0xff]
        %v239 = vld [vmem:[%s223 + $0x70] sm:$0xff]
        %v240 = vld [vmem:[%s223 + $0x78] sm:$0xff]
        %v241 = vcvt.f32.s32.to.zero.pseudo %v225
        %v242 = vcvt.f32.s32.to.zero.pseudo %v226
        %v243 = vcvt.f32.s32.to.zero.pseudo %v227
        %v244 = vcvt.f32.s32.to.zero.pseudo %v228
        %v245 = vcvt.f32.s32.to.zero.pseudo %v229
        %v246 = vcvt.f32.s32.to.zero.pseudo %v230
        %v247 = vcvt.f32.s32.to.zero.pseudo %v231
        %v248 = vcvt.f32.s32.to.zero.pseudo %v232
        %v249 = vcvt.f32.s32.to.zero.pseudo %v233
        %v250 = vcvt.f32.s32.to.zero.pseudo %v234
        %v251 = vcvt.f32.s32.to.zero.pseudo %v235
        %v252 = vcvt.f32.s32.to.zero.pseudo %v236
        %v253 = vcvt.f32.s32.to.zero.pseudo %v237
        %v254 = vcvt.f32.s32.to.zero.pseudo %v238
        %v255 = vcvt.f32.s32.to.zero.pseudo %v239
        %v256 = vcvt.f32.s32.to.zero.pseudo %v240
        %v257 = vld [vmem:[%s4] sm:$0x77]
        %v258 = vld [vmem:[%s1] sm:$0xff]
        %v259 = vld [vmem:[%s1 + $0x8] sm:$0xff]
        %v260 = vld [vmem:[%s1 + $0x10] sm:$0xff]
        %v261 = vld [vmem:[%s1 + $0x18] sm:$0xff]
        %v263 = vlaneseq
        %v264 = vshrl.u32 %v263, 7
        %v265 = vsub.s32 0, %v264
        %v266 = vrot.slane %v257, %v265
        %v267 = vlaneseq
        %v268 = vshrl.u32 %v267, 7
        %v269 = vsub.s32 4, %v268
        %v270 = vrot.slane %v257, %v269
        %v273 = vlaneseq
        %v274 = vshrl.u32 %v273, 7
        %v275 = vsub.s32 0, %v274
        %v276 = vrot.slane %v266, %v275
        %v277 = vlaneseq
        %v278 = vshrl.u32 %v277, 7
        %v279 = vsub.s32 0, %v278
        %v280 = vrot.slane %v270, %v279
        %vm281 = vcmask 130048
        %v283 = vsel %vm281, %v225, 0
        %v286 = vsel %vm281, %v226, 0
        %v289 = vsel %vm281, %v227, 0
        %v292 = vsel %vm281, %v228, 0
        %v295 = vsel %vm281, %v229, 0
        %v298 = vsel %vm281, %v230, 0
        %v301 = vsel %vm281, %v231, 0
        %v304 = vsel %vm281, %v232, 0
        %v307 = vsel %vm281, %v233, 0
        %v310 = vsel %vm281, %v234, 0
        %v313 = vsel %vm281, %v235, 0
        %v316 = vsel %vm281, %v236, 0
        %v319 = vsel %vm281, %v237, 0
        %v322 = vsel %vm281, %v238, 0
        %v325 = vsel %vm281, %v239, 0
        %v328 = vsel %vm281, %v240, 0
        %330 = vmatprep.subr.mxu0 0.0
        %331 = vmatpush1.msra.mxu0 0.0
        %332 = vmatprep.subr.mxu0 0.0
        %333 = vmatpush1.msra.mxu0 0.0
        %334 = vmatprep.subr.mxu0 0.0
        %335 = vmatpush1.msra.mxu0 0.0
        %336 = vmatprep.subr.mxu0 0.0
        %337 = vmatpush1.msra.mxu0 0.0
        %338 = vmatprep.subr.mxu0 0.0
        %339 = vmatpush1.msra.mxu0 0.0
        %340 = vmatprep.subr.mxu0 0.0
        %341 = vmatpush1.msra.mxu0 0.0
        %342 = vmatprep.subr.mxu0 0.0
        %343 = vmatpush1.msra.mxu0 0.0
        %344 = vmatprep.subr.mxu0 0.0
        %345 = vmatpush1.msra.mxu0 0.0
        %346 = vmatprep.subr.mxu0 0.0
        %347 = vmatpush1.msra.mxu0 0.0
        %348 = vmatprep.subr.mxu0 0.0
        %349 = vmatpush1.msra.mxu0 0.0
        %350 = vmatprep.subr.mxu0 0.0
        %351 = vmatpush1.msra.mxu0 0.0
        %352 = vmatprep.subr.mxu0 0.0
        %353 = vmatpush1.msra.mxu0 0.0
        %354 = vmatprep.subr.mxu0 0.0
        %355 = vmatpush1.msra.mxu0 0.0
        %356 = vmatprep.subr.mxu0 0.0
        %357 = vmatpush1.msra.mxu0 0.0
        %358 = vmatprep.subr.mxu0 %v261
        %359 = vmatpush1.msra.mxu0 %v260
        %360 = vmatprep.subr.mxu0 %v259
        %361 = vmatpush1.msra.mxu0 %v258
        %362 = vmatprep.subr.mxu0 0.0
        %363 = vmatpush2.msra.mxu0 0.0
        %364 = vmatprep.subr.mxu0 0.0
        %365 = vmatpush2.msra.mxu0 0.0
        %366 = vmatprep.subr.mxu0 0.0
        %367 = vmatpush2.msra.mxu0 0.0
        %368 = vmatprep.subr.mxu0 0.0
        %369 = vmatpush2.msra.mxu0 0.0
        %370 = vmatprep.subr.mxu0 0.0
        %371 = vmatpush2.msra.mxu0 0.0
        %372 = vmatprep.subr.mxu0 0.0
        %373 = vmatpush2.msra.mxu0 0.0
        %374 = vmatprep.subr.mxu0 0.0
        %375 = vmatpush2.msra.mxu0 0.0
        %376 = vmatprep.subr.mxu0 0.0
        %377 = vmatpush2.msra.mxu0 0.0
        %378 = vmatprep.subr.mxu0 0.0
        %379 = vmatpush2.msra.mxu0 0.0
        %380 = vmatprep.subr.mxu0 0.0
        %381 = vmatpush2.msra.mxu0 0.0
        %382 = vmatprep.subr.mxu0 0.0
        %383 = vmatpush2.msra.mxu0 0.0
        %384 = vmatprep.subr.mxu0 0.0
        %385 = vmatpush2.msra.mxu0 0.0
        %386 = vmatprep.subr.mxu0 0.0
        %387 = vmatpush2.msra.mxu0 0.0
        %388 = vmatprep.subr.mxu0 0.0
        %389 = vmatpush2.msra.mxu0 0.0
        %390 = vmatprep.subr.mxu0 0.0
        %391 = vmatpush2.msra.mxu0 0.0
        %392 = vmatprep.subr.mxu0 0.0
        %393 = vmatpush2.msra.mxu0 0.0
        %394 = vmatprep.mubr.f32.mxu0 0.0
        %395 = vmatmul.mubr.f32.gmra.mxu0 %v283
        %v396 = vpop.f32.mrf.mxu0
        %v397 = vadd.f32 %v276, %v396
        %v398 = vpop.f32.mrf.mxu0
        %v399 = vadd.f32 %v280, %v398
        %400 = vmatprep.mubr.f32.mxu0 0.0
        %401 = vmatmul.mubr.f32.gmra.mxu0 %v286
        %v402 = vpop.f32.mrf.mxu0
        %v403 = vadd.f32 %v276, %v402
        %v404 = vpop.f32.mrf.mxu0
        %v405 = vadd.f32 %v280, %v404
        %406 = vmatprep.mubr.f32.mxu0 0.0
        %407 = vmatmul.mubr.f32.gmra.mxu0 %v289
        %v408 = vpop.f32.mrf.mxu0
        %v409 = vadd.f32 %v276, %v408
        %v410 = vpop.f32.mrf.mxu0
        %v411 = vadd.f32 %v280, %v410
        %412 = vmatprep.mubr.f32.mxu0 0.0
        %413 = vmatmul.mubr.f32.gmra.mxu0 %v292
        %v414 = vpop.f32.mrf.mxu0
        %v415 = vadd.f32 %v276, %v414
        %v416 = vpop.f32.mrf.mxu0
        %v417 = vadd.f32 %v280, %v416
        %418 = vmatprep.mubr.f32.mxu0 0.0
        %419 = vmatmul.mubr.f32.gmra.mxu0 %v295
        %v420 = vpop.f32.mrf.mxu0
        %v421 = vadd.f32 %v276, %v420
        %v422 = vpop.f32.mrf.mxu0
        %v423 = vadd.f32 %v280, %v422
        %424 = vmatprep.mubr.f32.mxu0 0.0
        %425 = vmatmul.mubr.f32.gmra.mxu0 %v298
        %v426 = vpop.f32.mrf.mxu0
        %v427 = vadd.f32 %v276, %v426
        %v428 = vpop.f32.mrf.mxu0
        %v429 = vadd.f32 %v280, %v428
        %430 = vmatprep.mubr.f32.mxu0 0.0
        %431 = vmatmul.mubr.f32.gmra.mxu0 %v301
        %v432 = vpop.f32.mrf.mxu0
        %v433 = vadd.f32 %v276, %v432
        %v434 = vpop.f32.mrf.mxu0
        %v435 = vadd.f32 %v280, %v434
        %436 = vmatprep.mubr.f32.mxu0 0.0
        %437 = vmatmul.mubr.f32.gmra.mxu0 %v304
        %v438 = vpop.f32.mrf.mxu0
        %v439 = vadd.f32 %v276, %v438
        %v440 = vpop.f32.mrf.mxu0
        %v441 = vadd.f32 %v280, %v440
        %442 = vmatprep.mubr.f32.mxu0 0.0
        %443 = vmatmul.mubr.f32.gmra.mxu0 %v307
        %v444 = vpop.f32.mrf.mxu0
        %v445 = vadd.f32 %v276, %v444
        %v446 = vpop.f32.mrf.mxu0
        %v447 = vadd.f32 %v280, %v446
        %448 = vmatprep.mubr.f32.mxu0 0.0
        %449 = vmatmul.mubr.f32.gmra.mxu0 %v310
        %v450 = vpop.f32.mrf.mxu0
        %v451 = vadd.f32 %v276, %v450
        %v452 = vpop.f32.mrf.mxu0
        %v453 = vadd.f32 %v280, %v452
        %454 = vmatprep.mubr.f32.mxu0 0.0
        %455 = vmatmul.mubr.f32.gmra.mxu0 %v313
        %v456 = vpop.f32.mrf.mxu0
        %v457 = vadd.f32 %v276, %v456
        %v458 = vpop.f32.mrf.mxu0
        %v459 = vadd.f32 %v280, %v458
        %460 = vmatprep.mubr.f32.mxu0 0.0
        %461 = vmatmul.mubr.f32.gmra.mxu0 %v316
        %v462 = vpop.f32.mrf.mxu0
        %v463 = vadd.f32 %v276, %v462
        %v464 = vpop.f32.mrf.mxu0
        %v465 = vadd.f32 %v280, %v464
        %466 = vmatprep.mubr.f32.mxu0 0.0
        %467 = vmatmul.mubr.f32.gmra.mxu0 %v319
        %v468 = vpop.f32.mrf.mxu0
        %v469 = vadd.f32 %v276, %v468
        %v470 = vpop.f32.mrf.mxu0
        %v471 = vadd.f32 %v280, %v470
        %472 = vmatprep.mubr.f32.mxu0 0.0
        %473 = vmatmul.mubr.f32.gmra.mxu0 %v322
        %v474 = vpop.f32.mrf.mxu0
        %v475 = vadd.f32 %v276, %v474
        %v476 = vpop.f32.mrf.mxu0
        %v477 = vadd.f32 %v280, %v476
        %478 = vmatprep.mubr.f32.mxu0 0.0
        %479 = vmatmul.mubr.f32.gmra.mxu0 %v325
        %v480 = vpop.f32.mrf.mxu0
        %v481 = vadd.f32 %v276, %v480
        %v482 = vpop.f32.mrf.mxu0
        %v483 = vadd.f32 %v280, %v482
        %484 = vmatprep.mubr.f32.mxu0 0.0
        %485 = vmatmul.mubr.f32.gmra.mxu0 %v328
        %v486 = vpop.f32.mrf.mxu0
        %v487 = vadd.f32 %v276, %v486
        %v488 = vpop.f32.mrf.mxu0
        %v489 = vadd.f32 %v280, %v488
        %490 = vdwg.mxu0
        %v491 = vtanh.pop %v397
        %v492 = vtanh.pop %v403
        %v493 = vtanh.pop %v409
        %v494 = vtanh.pop %v415
        %v495 = vtanh.pop %v421
        %v496 = vtanh.pop %v427
        %v497 = vtanh.pop %v433
        %v498 = vtanh.pop %v439
        %v499 = vtanh.pop %v445
        %v500 = vtanh.pop %v451
        %v501 = vtanh.pop %v457
        %v502 = vtanh.pop %v463
        %v503 = vtanh.pop %v469
        %v504 = vtanh.pop %v475
        %v505 = vtanh.pop %v481
        %v506 = vtanh.pop %v487
        %v507 = vld [vmem:[%s2] sm:$0xff]
        %v508 = vld [vmem:[%s2 + $0x8] sm:$0xff]
        %v509 = vld [vmem:[%s2 + $0x10] sm:$0xff]
        %v510 = vld [vmem:[%s2 + $0x18] sm:$0xff]
        %v511 = vld [vmem:[%s2 + $0x20] sm:$0xff]
        %v512 = vld [vmem:[%s2 + $0x28] sm:$0xff]
        %v513 = vld [vmem:[%s2 + $0x30] sm:$0xff]
        %v514 = vld [vmem:[%s2 + $0x38] sm:$0xff]
        %v515 = vld [vmem:[%s2 + $0x40] sm:$0xff]
        %v516 = vld [vmem:[%s2 + $0x48] sm:$0xff]
        %v517 = vld [vmem:[%s2 + $0x50] sm:$0xff]
        %v518 = vld [vmem:[%s2 + $0x58] sm:$0xff]
        %v519 = vld [vmem:[%s2 + $0x60] sm:$0xff]
        %v520 = vld [vmem:[%s2 + $0x68] sm:$0xff]
        %v521 = vld [vmem:[%s2 + $0x70] sm:$0xff]
        %v522 = vld [vmem:[%s2 + $0x78] sm:$0xff]
        %v523 = vlaneseq
        %v524 = vshrl.u32 %v523, 7
        %v525 = vsub.s32 1, %v524
        %v526 = vrot.slane %v257, %v525
        %527 = vmatprep.subr.mxu0 0.0
        %528 = vmatpush1.msra.mxu0 %v522
        %529 = vmatprep.subr.mxu0 0.0
        %530 = vmatpush1.msra.mxu0 %v521
        %531 = vmatprep.subr.mxu0 0.0
        %532 = vmatpush1.msra.mxu0 %v520
        %533 = vmatprep.subr.mxu0 0.0
        %534 = vmatpush1.msra.mxu0 %v519
        %535 = vmatprep.subr.mxu0 0.0
        %536 = vmatpush1.msra.mxu0 %v518
        %537 = vmatprep.subr.mxu0 0.0
        %538 = vmatpush1.msra.mxu0 %v517
        %539 = vmatprep.subr.mxu0 0.0
        %540 = vmatpush1.msra.mxu0 %v516
        %541 = vmatprep.subr.mxu0 0.0
        %542 = vmatpush1.msra.mxu0 %v515
        %543 = vmatprep.subr.mxu0 0.0
        %544 = vmatpush1.msra.mxu0 %v514
        %545 = vmatprep.subr.mxu0 0.0
        %546 = vmatpush1.msra.mxu0 %v513
        %547 = vmatprep.subr.mxu0 0.0
        %548 = vmatpush1.msra.mxu0 %v512
        %549 = vmatprep.subr.mxu0 0.0
        %550 = vmatpush1.msra.mxu0 %v511
        %551 = vmatprep.subr.mxu0 0.0
        %552 = vmatpush1.msra.mxu0 %v510
        %553 = vmatprep.subr.mxu0 0.0
        %554 = vmatpush1.msra.mxu0 %v509
        %555 = vmatprep.subr.mxu0 0.0
        %556 = vmatpush1.msra.mxu0 %v508
        %557 = vmatprep.subr.mxu0 0.0
        %558 = vmatpush1.msra.mxu0 %v507
        %559 = vmatprep.subr.mxu0 0.0
        %560 = vmatpush2.msra.mxu0 0.0
        %561 = vmatprep.subr.mxu0 0.0
        %562 = vmatpush2.msra.mxu0 0.0
        %563 = vmatprep.subr.mxu0 0.0
        %564 = vmatpush2.msra.mxu0 0.0
        %565 = vmatprep.subr.mxu0 0.0
        %566 = vmatpush2.msra.mxu0 0.0
        %567 = vmatprep.subr.mxu0 0.0
        %568 = vmatpush2.msra.mxu0 0.0
        %569 = vmatprep.subr.mxu0 0.0
        %570 = vmatpush2.msra.mxu0 0.0
        %571 = vmatprep.subr.mxu0 0.0
        %572 = vmatpush2.msra.mxu0 0.0
        %573 = vmatprep.subr.mxu0 0.0
        %574 = vmatpush2.msra.mxu0 0.0
        %575 = vmatprep.subr.mxu0 0.0
        %576 = vmatpush2.msra.mxu0 0.0
        %577 = vmatprep.subr.mxu0 0.0
        %578 = vmatpush2.msra.mxu0 0.0
        %579 = vmatprep.subr.mxu0 0.0
        %580 = vmatpush2.msra.mxu0 0.0
        %581 = vmatprep.subr.mxu0 0.0
        %582 = vmatpush2.msra.mxu0 0.0
        %583 = vmatprep.subr.mxu0 0.0
        %584 = vmatpush2.msra.mxu0 0.0
        %585 = vmatprep.subr.mxu0 0.0
        %586 = vmatpush2.msra.mxu0 0.0
        %587 = vmatprep.subr.mxu0 0.0
        %588 = vmatpush2.msra.mxu0 0.0
        %589 = vmatprep.subr.mxu0 0.0
        %590 = vmatpush2.msra.mxu0 0.0
        %591 = vmatprep.mubr.f32.mxu0 0.0
        %592 = vmatmul.mubr.f32.gmra.mxu0 %v491
        %v593 = vpop.f32.mrf.mxu0
        %v594 = vadd.f32 %v526, %v593
        %v595 = vpop.f32.mrf.mxu0
        %596 = vmatprep.mubr.f32.mxu0 0.0
        %597 = vmatmul.mubr.f32.gmra.mxu0 %v492
        %v598 = vpop.f32.mrf.mxu0
        %v599 = vadd.f32 %v526, %v598
        %v600 = vpop.f32.mrf.mxu0
        %601 = vmatprep.mubr.f32.mxu0 0.0
        %602 = vmatmul.mubr.f32.gmra.mxu0 %v493
        %v603 = vpop.f32.mrf.mxu0
        %v604 = vadd.f32 %v526, %v603
        %v605 = vpop.f32.mrf.mxu0
        %606 = vmatprep.mubr.f32.mxu0 0.0
        %607 = vmatmul.mubr.f32.gmra.mxu0 %v494
        %v608 = vpop.f32.mrf.mxu0
        %v609 = vadd.f32 %v526, %v608
        %v610 = vpop.f32.mrf.mxu0
        %611 = vmatprep.mubr.f32.mxu0 0.0
        %612 = vmatmul.mubr.f32.gmra.mxu0 %v495
        %v613 = vpop.f32.mrf.mxu0
        %v614 = vadd.f32 %v526, %v613
        %v615 = vpop.f32.mrf.mxu0
        %616 = vmatprep.mubr.f32.mxu0 0.0
        %617 = vmatmul.mubr.f32.gmra.mxu0 %v496
        %v618 = vpop.f32.mrf.mxu0
        %v619 = vadd.f32 %v526, %v618
        %v620 = vpop.f32.mrf.mxu0
        %621 = vmatprep.mubr.f32.mxu0 0.0
        %622 = vmatmul.mubr.f32.gmra.mxu0 %v497
        %v623 = vpop.f32.mrf.mxu0
        %v624 = vadd.f32 %v526, %v623
        %v625 = vpop.f32.mrf.mxu0
        %626 = vmatprep.mubr.f32.mxu0 0.0
        %627 = vmatmul.mubr.f32.gmra.mxu0 %v498
        %v628 = vpop.f32.mrf.mxu0
        %v629 = vadd.f32 %v526, %v628
        %v630 = vpop.f32.mrf.mxu0
        %631 = vmatprep.mubr.f32.mxu0 0.0
        %632 = vmatmul.mubr.f32.gmra.mxu0 %v499
        %v633 = vpop.f32.mrf.mxu0
        %v634 = vadd.f32 %v526, %v633
        %v635 = vpop.f32.mrf.mxu0
        %636 = vmatprep.mubr.f32.mxu0 0.0
        %637 = vmatmul.mubr.f32.gmra.mxu0 %v500
        %v638 = vpop.f32.mrf.mxu0
        %v639 = vadd.f32 %v526, %v638
        %v640 = vpop.f32.mrf.mxu0
        %641 = vmatprep.mubr.f32.mxu0 0.0
        %642 = vmatmul.mubr.f32.gmra.mxu0 %v501
        %v643 = vpop.f32.mrf.mxu0
        %v644 = vadd.f32 %v526, %v643
        %v645 = vpop.f32.mrf.mxu0
        %646 = vmatprep.mubr.f32.mxu0 0.0
        %647 = vmatmul.mubr.f32.gmra.mxu0 %v502
        %v648 = vpop.f32.mrf.mxu0
        %v649 = vadd.f32 %v526, %v648
        %v650 = vpop.f32.mrf.mxu0
        %651 = vmatprep.mubr.f32.mxu0 0.0
        %652 = vmatmul.mubr.f32.gmra.mxu0 %v503
        %v653 = vpop.f32.mrf.mxu0
        %v654 = vadd.f32 %v526, %v653
        %v655 = vpop.f32.mrf.mxu0
        %656 = vmatprep.mubr.f32.mxu0 0.0
        %657 = vmatmul.mubr.f32.gmra.mxu0 %v504
        %v658 = vpop.f32.mrf.mxu0
        %v659 = vadd.f32 %v526, %v658
        %v660 = vpop.f32.mrf.mxu0
        %661 = vmatprep.mubr.f32.mxu0 0.0
        %662 = vmatmul.mubr.f32.gmra.mxu0 %v505
        %v663 = vpop.f32.mrf.mxu0
        %v664 = vadd.f32 %v526, %v663
        %v665 = vpop.f32.mrf.mxu0
        %666 = vmatprep.mubr.f32.mxu0 0.0
        %667 = vmatmul.mubr.f32.gmra.mxu0 %v506
        %v668 = vpop.f32.mrf.mxu0
        %v669 = vadd.f32 %v526, %v668
        %v670 = vpop.f32.mrf.mxu0
        %671 = vdwg.mxu0
        %v672 = vtanh.pop %v594
        %v673 = vtanh.pop %v599
        %v674 = vtanh.pop %v604
        %v675 = vtanh.pop %v609
        %v676 = vtanh.pop %v614
        %v677 = vtanh.pop %v619
        %v678 = vtanh.pop %v624
        %v679 = vtanh.pop %v629
        %v680 = vtanh.pop %v634
        %v681 = vtanh.pop %v639
        %v682 = vtanh.pop %v644
        %v683 = vtanh.pop %v649
        %v684 = vtanh.pop %v654
        %v685 = vtanh.pop %v659
        %v686 = vtanh.pop %v664
        %v687 = vtanh.pop %v669
        %v688 = vld [vmem:[%s3] sm:$0xff]
        %v689 = vld [vmem:[%s3 + $0x8] sm:$0xff]
        %v690 = vld [vmem:[%s3 + $0x10] sm:$0xff]
        %v691 = vld [vmem:[%s3 + $0x18] sm:$0xff]
        %v692 = vld [vmem:[%s3 + $0x20] sm:$0xff]
        %v693 = vld [vmem:[%s3 + $0x28] sm:$0xff]
        %v694 = vld [vmem:[%s3 + $0x30] sm:$0xff]
        %v695 = vld [vmem:[%s3 + $0x38] sm:$0xff]
        %v696 = vld [vmem:[%s3 + $0x40] sm:$0xff]
        %v697 = vld [vmem:[%s3 + $0x48] sm:$0xff]
        %v698 = vld [vmem:[%s3 + $0x50] sm:$0xff]
        %v699 = vld [vmem:[%s3 + $0x58] sm:$0xff]
        %v700 = vld [vmem:[%s3 + $0x60] sm:$0xff]
        %v701 = vld [vmem:[%s3 + $0x68] sm:$0xff]
        %v702 = vld [vmem:[%s3 + $0x70] sm:$0xff]
        %v703 = vld [vmem:[%s3 + $0x78] sm:$0xff]
        %v704 = vlaneseq
        %v705 = vshrl.u32 %v704, 7
        %v706 = vsub.s32 2, %v705
        %v707 = vrot.slane %v257, %v706
        %708 = vmatprep.subr.mxu0 0.0
        %709 = vmatpush1.msra.mxu0 %v703
        %710 = vmatprep.subr.mxu0 0.0
        %711 = vmatpush1.msra.mxu0 %v702
        %712 = vmatprep.subr.mxu0 0.0
        %713 = vmatpush1.msra.mxu0 %v701
        %714 = vmatprep.subr.mxu0 0.0
        %715 = vmatpush1.msra.mxu0 %v700
        %716 = vmatprep.subr.mxu0 0.0
        %717 = vmatpush1.msra.mxu0 %v699
        %718 = vmatprep.subr.mxu0 0.0
        %719 = vmatpush1.msra.mxu0 %v698
        %720 = vmatprep.subr.mxu0 0.0
        %721 = vmatpush1.msra.mxu0 %v697
        %722 = vmatprep.subr.mxu0 0.0
        %723 = vmatpush1.msra.mxu0 %v696
        %724 = vmatprep.subr.mxu0 0.0
        %725 = vmatpush1.msra.mxu0 %v695
        %726 = vmatprep.subr.mxu0 0.0
        %727 = vmatpush1.msra.mxu0 %v694
        %728 = vmatprep.subr.mxu0 0.0
        %729 = vmatpush1.msra.mxu0 %v693
        %730 = vmatprep.subr.mxu0 0.0
        %731 = vmatpush1.msra.mxu0 %v692
        %732 = vmatprep.subr.mxu0 0.0
        %733 = vmatpush1.msra.mxu0 %v691
        %734 = vmatprep.subr.mxu0 0.0
        %735 = vmatpush1.msra.mxu0 %v690
        %736 = vmatprep.subr.mxu0 0.0
        %737 = vmatpush1.msra.mxu0 %v689
        %738 = vmatprep.subr.mxu0 0.0
        %739 = vmatpush1.msra.mxu0 %v688
        %740 = vmatprep.subr.mxu0 0.0
        %741 = vmatpush2.msra.mxu0 0.0
        %742 = vmatprep.subr.mxu0 0.0
        %743 = vmatpush2.msra.mxu0 0.0
        %744 = vmatprep.subr.mxu0 0.0
        %745 = vmatpush2.msra.mxu0 0.0
        %746 = vmatprep.subr.mxu0 0.0
        %747 = vmatpush2.msra.mxu0 0.0
        %748 = vmatprep.subr.mxu0 0.0
        %749 = vmatpush2.msra.mxu0 0.0
        %750 = vmatprep.subr.mxu0 0.0
        %751 = vmatpush2.msra.mxu0 0.0
        %752 = vmatprep.subr.mxu0 0.0
        %753 = vmatpush2.msra.mxu0 0.0
        %754 = vmatprep.subr.mxu0 0.0
        %755 = vmatpush2.msra.mxu0 0.0
        %756 = vmatprep.subr.mxu0 0.0
        %757 = vmatpush2.msra.mxu0 0.0
        %758 = vmatprep.subr.mxu0 0.0
        %759 = vmatpush2.msra.mxu0 0.0
        %760 = vmatprep.subr.mxu0 0.0
        %761 = vmatpush2.msra.mxu0 0.0
        %762 = vmatprep.subr.mxu0 0.0
        %763 = vmatpush2.msra.mxu0 0.0
        %764 = vmatprep.subr.mxu0 0.0
        %765 = vmatpush2.msra.mxu0 0.0
        %766 = vmatprep.subr.mxu0 0.0
        %767 = vmatpush2.msra.mxu0 0.0
        %768 = vmatprep.subr.mxu0 0.0
        %769 = vmatpush2.msra.mxu0 0.0
        %770 = vmatprep.subr.mxu0 0.0
        %771 = vmatpush2.msra.mxu0 0.0
        %772 = vmatprep.mubr.f32.mxu0 0.0
        %773 = vmatmul.mubr.f32.gmra.mxu0 %v672
        %v774 = vpop.f32.mrf.mxu0
        %v775 = vadd.f32 %v707, %v774
        %v776 = vpop.f32.mrf.mxu0
        %777 = vmatprep.mubr.f32.mxu0 0.0
        %778 = vmatmul.mubr.f32.gmra.mxu0 %v673
        %v779 = vpop.f32.mrf.mxu0
        %v780 = vadd.f32 %v707, %v779
        %v781 = vpop.f32.mrf.mxu0
        %782 = vmatprep.mubr.f32.mxu0 0.0
        %783 = vmatmul.mubr.f32.gmra.mxu0 %v674
        %v784 = vpop.f32.mrf.mxu0
        %v785 = vadd.f32 %v707, %v784
        %v786 = vpop.f32.mrf.mxu0
        %787 = vmatprep.mubr.f32.mxu0 0.0
        %788 = vmatmul.mubr.f32.gmra.mxu0 %v675
        %v789 = vpop.f32.mrf.mxu0
        %v790 = vadd.f32 %v707, %v789
        %v791 = vpop.f32.mrf.mxu0
        %792 = vmatprep.mubr.f32.mxu0 0.0
        %793 = vmatmul.mubr.f32.gmra.mxu0 %v676
        %v794 = vpop.f32.mrf.mxu0
        %v795 = vadd.f32 %v707, %v794
        %v796 = vpop.f32.mrf.mxu0
        %797 = vmatprep.mubr.f32.mxu0 0.0
        %798 = vmatmul.mubr.f32.gmra.mxu0 %v677
        %v799 = vpop.f32.mrf.mxu0
        %v800 = vadd.f32 %v707, %v799
        %v801 = vpop.f32.mrf.mxu0
        %802 = vmatprep.mubr.f32.mxu0 0.0
        %803 = vmatmul.mubr.f32.gmra.mxu0 %v678
        %v804 = vpop.f32.mrf.mxu0
        %v805 = vadd.f32 %v707, %v804
        %v806 = vpop.f32.mrf.mxu0
        %807 = vmatprep.mubr.f32.mxu0 0.0
        %808 = vmatmul.mubr.f32.gmra.mxu0 %v679
        %v809 = vpop.f32.mrf.mxu0
        %v810 = vadd.f32 %v707, %v809
        %v811 = vpop.f32.mrf.mxu0
        %812 = vmatprep.mubr.f32.mxu0 0.0
        %813 = vmatmul.mubr.f32.gmra.mxu0 %v680
        %v814 = vpop.f32.mrf.mxu0
        %v815 = vadd.f32 %v707, %v814
        %v816 = vpop.f32.mrf.mxu0
        %817 = vmatprep.mubr.f32.mxu0 0.0
        %818 = vmatmul.mubr.f32.gmra.mxu0 %v681
        %v819 = vpop.f32.mrf.mxu0
        %v820 = vadd.f32 %v707, %v819
        %v821 = vpop.f32.mrf.mxu0
        %822 = vmatprep.mubr.f32.mxu0 0.0
        %823 = vmatmul.mubr.f32.gmra.mxu0 %v682
        %v824 = vpop.f32.mrf.mxu0
        %v825 = vadd.f32 %v707, %v824
        %v826 = vpop.f32.mrf.mxu0
        %827 = vmatprep.mubr.f32.mxu0 0.0
        %828 = vmatmul.mubr.f32.gmra.mxu0 %v683
        %v829 = vpop.f32.mrf.mxu0
        %v830 = vadd.f32 %v707, %v829
        %v831 = vpop.f32.mrf.mxu0
        %832 = vmatprep.mubr.f32.mxu0 0.0
        %833 = vmatmul.mubr.f32.gmra.mxu0 %v684
        %v834 = vpop.f32.mrf.mxu0
        %v835 = vadd.f32 %v707, %v834
        %v836 = vpop.f32.mrf.mxu0
        %837 = vmatprep.mubr.f32.mxu0 0.0
        %838 = vmatmul.mubr.f32.gmra.mxu0 %v685
        %v839 = vpop.f32.mrf.mxu0
        %v840 = vadd.f32 %v707, %v839
        %v841 = vpop.f32.mrf.mxu0
        %842 = vmatprep.mubr.f32.mxu0 0.0
        %843 = vmatmul.mubr.f32.gmra.mxu0 %v686
        %v844 = vpop.f32.mrf.mxu0
        %v845 = vadd.f32 %v707, %v844
        %v846 = vpop.f32.mrf.mxu0
        %847 = vmatprep.mubr.f32.mxu0 0.0
        %848 = vmatmul.mubr.f32.gmra.mxu0 %v687
        %v849 = vpop.f32.mrf.mxu0
        %v850 = vadd.f32 %v707, %v849
        %v851 = vpop.f32.mrf.mxu0
        %852 = vdwg.mxu0
        %vm853 = vcmp.gt.f32.partialorder %v399, 0.0
        %vm854 = vcmp.gt.f32.partialorder %v405, 0.0
        %vm855 = vcmp.gt.f32.partialorder %v411, 0.0
        %vm856 = vcmp.gt.f32.partialorder %v417, 0.0
        %vm857 = vcmp.gt.f32.partialorder %v423, 0.0
        %vm858 = vcmp.gt.f32.partialorder %v429, 0.0
        %vm859 = vcmp.gt.f32.partialorder %v435, 0.0
        %vm860 = vcmp.gt.f32.partialorder %v441, 0.0
        %vm861 = vcmp.gt.f32.partialorder %v447, 0.0
        %vm862 = vcmp.gt.f32.partialorder %v453, 0.0
        %vm863 = vcmp.gt.f32.partialorder %v459, 0.0
        %vm864 = vcmp.gt.f32.partialorder %v465, 0.0
        %vm865 = vcmp.gt.f32.partialorder %v471, 0.0
        %vm866 = vcmp.gt.f32.partialorder %v477, 0.0
        %vm867 = vcmp.gt.f32.partialorder %v483, 0.0
        %vm868 = vcmp.gt.f32.partialorder %v489, 0.0
        %v869 = vsel %vm853, 0.0, -18.420681
        %v870 = vsel %vm854, 0.0, -18.420681
        %v871 = vsel %vm855, 0.0, -18.420681
        %v872 = vsel %vm856, 0.0, -18.420681
        %v873 = vsel %vm857, 0.0, -18.420681
        %v874 = vsel %vm858, 0.0, -18.420681
        %v875 = vsel %vm859, 0.0, -18.420681
        %v876 = vsel %vm860, 0.0, -18.420681
        %v877 = vsel %vm861, 0.0, -18.420681
        %v878 = vsel %vm862, 0.0, -18.420681
        %v879 = vsel %vm863, 0.0, -18.420681
        %v880 = vsel %vm864, 0.0, -18.420681
        %v881 = vsel %vm865, 0.0, -18.420681
        %v882 = vsel %vm866, 0.0, -18.420681
        %v883 = vsel %vm867, 0.0, -18.420681
        %v884 = vsel %vm868, 0.0, -18.420681
        %v885 = vadd.f32 %v775, %v869
        %v886 = vadd.f32 %v780, %v870
        %v887 = vadd.f32 %v785, %v871
        %v888 = vadd.f32 %v790, %v872
        %v889 = vadd.f32 %v795, %v873
        %v890 = vadd.f32 %v800, %v874
        %v891 = vadd.f32 %v805, %v875
        %v892 = vadd.f32 %v810, %v876
        %v893 = vadd.f32 %v815, %v877
        %v894 = vadd.f32 %v820, %v878
        %v895 = vadd.f32 %v825, %v879
        %v896 = vadd.f32 %v830, %v880
        %v897 = vadd.f32 %v835, %v881
        %v898 = vadd.f32 %v840, %v882
        %v899 = vadd.f32 %v845, %v883
        %v900 = vadd.f32 %v850, %v884
        %vm901 = vcmask 64512
        %v902 = vsel %vm901, %v885, -inf
        %903 = vmax.xlane.f32.xlu0 %v902
        %v904 = vpop.xlane.xlu0 %903
        %v905 = vsel %vm901, %v886, -inf
        %906 = vmax.xlane.f32.xlu0 %v905
        %v907 = vpop.xlane.xlu0 %906
        %v908 = vsel %vm901, %v887, -inf
        %909 = vmax.xlane.f32.xlu0 %v908
        %v910 = vpop.xlane.xlu0 %909
        %v911 = vsel %vm901, %v888, -inf
        %912 = vmax.xlane.f32.xlu0 %v911
        %v913 = vpop.xlane.xlu0 %912
        %v914 = vsel %vm901, %v889, -inf
        %915 = vmax.xlane.f32.xlu0 %v914
        %v916 = vpop.xlane.xlu0 %915
        %v917 = vsel %vm901, %v890, -inf
        %918 = vmax.xlane.f32.xlu0 %v917
        %v919 = vpop.xlane.xlu0 %918
        %v920 = vsel %vm901, %v891, -inf
        %921 = vmax.xlane.f32.xlu0 %v920
        %v922 = vpop.xlane.xlu0 %921
        %v923 = vsel %vm901, %v892, -inf
        %924 = vmax.xlane.f32.xlu0 %v923
        %v925 = vpop.xlane.xlu0 %924
        %v926 = vsel %vm901, %v893, -inf
        %927 = vmax.xlane.f32.xlu0 %v926
        %v928 = vpop.xlane.xlu0 %927
        %v929 = vsel %vm901, %v894, -inf
        %930 = vmax.xlane.f32.xlu0 %v929
        %v931 = vpop.xlane.xlu0 %930
        %v932 = vsel %vm901, %v895, -inf
        %933 = vmax.xlane.f32.xlu0 %v932
        %v934 = vpop.xlane.xlu0 %933
        %v935 = vsel %vm901, %v896, -inf
        %936 = vmax.xlane.f32.xlu0 %v935
        %v937 = vpop.xlane.xlu0 %936
        %v938 = vsel %vm901, %v897, -inf
        %939 = vmax.xlane.f32.xlu0 %v938
        %v940 = vpop.xlane.xlu0 %939
        %v941 = vsel %vm901, %v898, -inf
        %942 = vmax.xlane.f32.xlu0 %v941
        %v943 = vpop.xlane.xlu0 %942
        %v944 = vsel %vm901, %v899, -inf
        %945 = vmax.xlane.f32.xlu0 %v944
        %v946 = vpop.xlane.xlu0 %945
        %v947 = vsel %vm901, %v900, -inf
        %948 = vmax.xlane.f32.xlu0 %v947
        %v949 = vpop.xlane.xlu0 %948
        %v950 = vsub.f32 %v885, %v904
        %v951 = vsub.f32 %v886, %v907
        %v952 = vsub.f32 %v887, %v910
        %v953 = vsub.f32 %v888, %v913
        %v954 = vsub.f32 %v889, %v916
        %v955 = vsub.f32 %v890, %v919
        %v956 = vsub.f32 %v891, %v922
        %v957 = vsub.f32 %v892, %v925
        %v958 = vsub.f32 %v893, %v928
        %v959 = vsub.f32 %v894, %v931
        %v960 = vsub.f32 %v895, %v934
        %v961 = vsub.f32 %v896, %v937
        %v962 = vsub.f32 %v897, %v940
        %v963 = vsub.f32 %v898, %v943
        %v964 = vsub.f32 %v899, %v946
        %v965 = vsub.f32 %v900, %v949
        %v966 = vmul.f32 %v950, 1.442695
        %v967 = vpow.pop %v966
        %v968 = vmul.f32 %v951, 1.442695
        %v969 = vpow.pop %v968
        %v970 = vmul.f32 %v952, 1.442695
        %v971 = vpow.pop %v970
        %v972 = vmul.f32 %v953, 1.442695
        %v973 = vpow.pop %v972
        %v974 = vmul.f32 %v954, 1.442695
        %v975 = vpow.pop %v974
        %v976 = vmul.f32 %v955, 1.442695
        %v977 = vpow.pop %v976
        %v978 = vmul.f32 %v956, 1.442695
        %v979 = vpow.pop %v978
        %v980 = vmul.f32 %v957, 1.442695
        %v981 = vpow.pop %v980
        %v982 = vmul.f32 %v958, 1.442695
        %v983 = vpow.pop %v982
        %v984 = vmul.f32 %v959, 1.442695
        %v985 = vpow.pop %v984
        %v986 = vmul.f32 %v960, 1.442695
        %v987 = vpow.pop %v986
        %v988 = vmul.f32 %v961, 1.442695
        %v989 = vpow.pop %v988
        %v990 = vmul.f32 %v962, 1.442695
        %v991 = vpow.pop %v990
        %v992 = vmul.f32 %v963, 1.442695
        %v993 = vpow.pop %v992
        %v994 = vmul.f32 %v964, 1.442695
        %v995 = vpow.pop %v994
        %v996 = vmul.f32 %v965, 1.442695
        %v997 = vpow.pop %v996
        %v998 = vsel %vm901, %v967, 0.0
        %999 = vadd.xlane.f32.xlu0 %v998
        %v1000 = vpop.xlane.xlu0 %999
        %v1001 = vsel %vm901, %v969, 0.0
        %1002 = vadd.xlane.f32.xlu0 %v1001
        %v1003 = vpop.xlane.xlu0 %1002
        %v1004 = vsel %vm901, %v971, 0.0
        %1005 = vadd.xlane.f32.xlu0 %v1004
        %v1006 = vpop.xlane.xlu0 %1005
        %v1007 = vsel %vm901, %v973, 0.0
        %1008 = vadd.xlane.f32.xlu0 %v1007
        %v1009 = vpop.xlane.xlu0 %1008
        %v1010 = vsel %vm901, %v975, 0.0
        %1011 = vadd.xlane.f32.xlu0 %v1010
        %v1012 = vpop.xlane.xlu0 %1011
        %v1013 = vsel %vm901, %v977, 0.0
        %1014 = vadd.xlane.f32.xlu0 %v1013
        %v1015 = vpop.xlane.xlu0 %1014
        %v1016 = vsel %vm901, %v979, 0.0
        %1017 = vadd.xlane.f32.xlu0 %v1016
        %v1018 = vpop.xlane.xlu0 %1017
        %v1019 = vsel %vm901, %v981, 0.0
        %1020 = vadd.xlane.f32.xlu0 %v1019
        %v1021 = vpop.xlane.xlu0 %1020
        %v1022 = vsel %vm901, %v983, 0.0
        %1023 = vadd.xlane.f32.xlu0 %v1022
        %v1024 = vpop.xlane.xlu0 %1023
        %v1025 = vsel %vm901, %v985, 0.0
        %1026 = vadd.xlane.f32.xlu0 %v1025
        %v1027 = vpop.xlane.xlu0 %1026
        %v1028 = vsel %vm901, %v987, 0.0
        %1029 = vadd.xlane.f32.xlu0 %v1028
        %v1030 = vpop.xlane.xlu0 %1029
        %v1031 = vsel %vm901, %v989, 0.0
        %1032 = vadd.xlane.f32.xlu0 %v1031
        %v1033 = vpop.xlane.xlu0 %1032
        %v1034 = vsel %vm901, %v991, 0.0
        %1035 = vadd.xlane.f32.xlu0 %v1034
        %v1036 = vpop.xlane.xlu0 %1035
        %v1037 = vsel %vm901, %v993, 0.0
        %1038 = vadd.xlane.f32.xlu0 %v1037
        %v1039 = vpop.xlane.xlu0 %1038
        %v1040 = vsel %vm901, %v995, 0.0
        %1041 = vadd.xlane.f32.xlu0 %v1040
        %v1042 = vpop.xlane.xlu0 %1041
        %v1043 = vsel %vm901, %v997, 0.0
        %1044 = vadd.xlane.f32.xlu0 %v1043
        %v1045 = vpop.xlane.xlu0 %1044
        %v1046 = vlog2.pop %v1000
        %v1047 = vmul.f32 %v1046, 0.6931472
        %v1048 = vlog2.pop %v1003
        %v1049 = vmul.f32 %v1048, 0.6931472
        %v1050 = vlog2.pop %v1006
        %v1051 = vmul.f32 %v1050, 0.6931472
        %v1052 = vlog2.pop %v1009
        %v1053 = vmul.f32 %v1052, 0.6931472
        %v1054 = vlog2.pop %v1012
        %v1055 = vmul.f32 %v1054, 0.6931472
        %v1056 = vlog2.pop %v1015
        %v1057 = vmul.f32 %v1056, 0.6931472
        %v1058 = vlog2.pop %v1018
        %v1059 = vmul.f32 %v1058, 0.6931472
        %v1060 = vlog2.pop %v1021
        %v1061 = vmul.f32 %v1060, 0.6931472
        %v1062 = vlog2.pop %v1024
        %v1063 = vmul.f32 %v1062, 0.6931472
        %v1064 = vlog2.pop %v1027
        %v1065 = vmul.f32 %v1064, 0.6931472
        %v1066 = vlog2.pop %v1030
        %v1067 = vmul.f32 %v1066, 0.6931472
        %v1068 = vlog2.pop %v1033
        %v1069 = vmul.f32 %v1068, 0.6931472
        %v1070 = vlog2.pop %v1036
        %v1071 = vmul.f32 %v1070, 0.6931472
        %v1072 = vlog2.pop %v1039
        %v1073 = vmul.f32 %v1072, 0.6931472
        %v1074 = vlog2.pop %v1042
        %v1075 = vmul.f32 %v1074, 0.6931472
        %v1076 = vlog2.pop %v1045
        %v1077 = vmul.f32 %v1076, 0.6931472
        %v1078 = vadd.f32 %v904, %v1047
        %v1079 = vadd.f32 %v907, %v1049
        %v1080 = vadd.f32 %v910, %v1051
        %v1081 = vadd.f32 %v913, %v1053
        %v1082 = vadd.f32 %v916, %v1055
        %v1083 = vadd.f32 %v919, %v1057
        %v1084 = vadd.f32 %v922, %v1059
        %v1085 = vadd.f32 %v925, %v1061
        %v1086 = vadd.f32 %v928, %v1063
        %v1087 = vadd.f32 %v931, %v1065
        %v1088 = vadd.f32 %v934, %v1067
        %v1089 = vadd.f32 %v937, %v1069
        %v1090 = vadd.f32 %v940, %v1071
        %v1091 = vadd.f32 %v943, %v1073
        %v1092 = vadd.f32 %v946, %v1075
        %v1093 = vadd.f32 %v949, %v1077
        %v1094 = vsub.f32 %v885, %v1078
        %v1095 = vsub.f32 %v886, %v1079
        %v1096 = vsub.f32 %v887, %v1080
        %v1097 = vsub.f32 %v888, %v1081
        %v1098 = vsub.f32 %v889, %v1082
        %v1099 = vsub.f32 %v890, %v1083
        %v1100 = vsub.f32 %v891, %v1084
        %v1101 = vsub.f32 %v892, %v1085
        %v1102 = vsub.f32 %v893, %v1086
        %v1103 = vsub.f32 %v894, %v1087
        %v1104 = vsub.f32 %v895, %v1088
        %v1105 = vsub.f32 %v896, %v1089
        %v1106 = vsub.f32 %v897, %v1090
        %v1107 = vsub.f32 %v898, %v1091
        %v1108 = vsub.f32 %v899, %v1092
        %v1109 = vsub.f32 %v900, %v1093
        %v1110 = vmul.f32 %v1094, 1.442695
        %v1111 = vpow.pop %v1110
        %v1112 = vmul.f32 %v1095, 1.442695
        %v1113 = vpow.pop %v1112
        %v1114 = vmul.f32 %v1096, 1.442695
        %v1115 = vpow.pop %v1114
        %v1116 = vmul.f32 %v1097, 1.442695
        %v1117 = vpow.pop %v1116
        %v1118 = vmul.f32 %v1098, 1.442695
        %v1119 = vpow.pop %v1118
        %v1120 = vmul.f32 %v1099, 1.442695
        %v1121 = vpow.pop %v1120
        %v1122 = vmul.f32 %v1100, 1.442695
        %v1123 = vpow.pop %v1122
        %v1124 = vmul.f32 %v1101, 1.442695
        %v1125 = vpow.pop %v1124
        %v1126 = vmul.f32 %v1102, 1.442695
        %v1127 = vpow.pop %v1126
        %v1128 = vmul.f32 %v1103, 1.442695
        %v1129 = vpow.pop %v1128
        %v1130 = vmul.f32 %v1104, 1.442695
        %v1131 = vpow.pop %v1130
        %v1132 = vmul.f32 %v1105, 1.442695
        %v1133 = vpow.pop %v1132
        %v1134 = vmul.f32 %v1106, 1.442695
        %v1135 = vpow.pop %v1134
        %v1136 = vmul.f32 %v1107, 1.442695
        %v1137 = vpow.pop %v1136
        %v1138 = vmul.f32 %v1108, 1.442695
        %v1139 = vpow.pop %v1138
        %v1140 = vmul.f32 %v1109, 1.442695
        %v1141 = vpow.pop %v1140
        %v1142 = vlaneseq
        %v1143 = vand.u32 %v1142, 127
        %1144 = vset.pattern.permute.xlu0 16
        %1145 = vperm.xlu0 %1144, %v241
        %v1146 = vpop.permute.xlu0 %1145
        %1147 = vset.pattern.permute.xlu0 16
        %1148 = vperm.xlu0 %1147, %v242
        %v1149 = vpop.permute.xlu0 %1148
        %1150 = vset.pattern.permute.xlu0 16
        %1151 = vperm.xlu0 %1150, %v243
        %v1152 = vpop.permute.xlu0 %1151
        %1153 = vset.pattern.permute.xlu0 16
        %1154 = vperm.xlu0 %1153, %v244
        %v1155 = vpop.permute.xlu0 %1154
        %1156 = vset.pattern.permute.xlu0 16
        %1157 = vperm.xlu0 %1156, %v245
        %v1158 = vpop.permute.xlu0 %1157
        %1159 = vset.pattern.permute.xlu0 16
        %1160 = vperm.xlu0 %1159, %v246
        %v1161 = vpop.permute.xlu0 %1160
        %1162 = vset.pattern.permute.xlu0 16
        %1163 = vperm.xlu0 %1162, %v247
        %v1164 = vpop.permute.xlu0 %1163
        %1165 = vset.pattern.permute.xlu0 16
        %1166 = vperm.xlu0 %1165, %v248
        %v1167 = vpop.permute.xlu0 %1166
        %1168 = vset.pattern.permute.xlu0 16
        %1169 = vperm.xlu0 %1168, %v249
        %v1170 = vpop.permute.xlu0 %1169
        %1171 = vset.pattern.permute.xlu0 16
        %1172 = vperm.xlu0 %1171, %v250
        %v1173 = vpop.permute.xlu0 %1172
        %1174 = vset.pattern.permute.xlu0 16
        %1175 = vperm.xlu0 %1174, %v251
        %v1176 = vpop.permute.xlu0 %1175
        %1177 = vset.pattern.permute.xlu0 16
        %1178 = vperm.xlu0 %1177, %v252
        %v1179 = vpop.permute.xlu0 %1178
        %1180 = vset.pattern.permute.xlu0 16
        %1181 = vperm.xlu0 %1180, %v253
        %v1182 = vpop.permute.xlu0 %1181
        %1183 = vset.pattern.permute.xlu0 16
        %1184 = vperm.xlu0 %1183, %v254
        %v1185 = vpop.permute.xlu0 %1184
        %1186 = vset.pattern.permute.xlu0 16
        %1187 = vperm.xlu0 %1186, %v255
        %v1188 = vpop.permute.xlu0 %1187
        %1189 = vset.pattern.permute.xlu0 16
        %1190 = vperm.xlu0 %1189, %v256
        %v1191 = vpop.permute.xlu0 %1190
        %vm1192 = vcmp.eq.s32.totalorder %v1143, %v1146
        %vm1193 = vcmp.eq.s32.totalorder %v1143, %v1149
        %vm1194 = vcmp.eq.s32.totalorder %v1143, %v1152
        %vm1195 = vcmp.eq.s32.totalorder %v1143, %v1155
        %vm1196 = vcmp.eq.s32.totalorder %v1143, %v1158
        %vm1197 = vcmp.eq.s32.totalorder %v1143, %v1161
        %vm1198 = vcmp.eq.s32.totalorder %v1143, %v1164
        %vm1199 = vcmp.eq.s32.totalorder %v1143, %v1167
        %vm1200 = vcmp.eq.s32.totalorder %v1143, %v1170
        %vm1201 = vcmp.eq.s32.totalorder %v1143, %v1173
        %vm1202 = vcmp.eq.s32.totalorder %v1143, %v1176
        %vm1203 = vcmp.eq.s32.totalorder %v1143, %v1179
        %vm1204 = vcmp.eq.s32.totalorder %v1143, %v1182
        %vm1205 = vcmp.eq.s32.totalorder %v1143, %v1185
        %vm1206 = vcmp.eq.s32.totalorder %v1143, %v1188
        %vm1207 = vcmp.eq.s32.totalorder %v1143, %v1191
        %v1208 = vsel %vm1192, %v1094, 0.0
        %v1209 = vsel %vm1193, %v1095, 0.0
        %v1210 = vsel %vm1194, %v1096, 0.0
        %v1211 = vsel %vm1195, %v1097, 0.0
        %v1212 = vsel %vm1196, %v1098, 0.0
        %v1213 = vsel %vm1197, %v1099, 0.0
        %v1214 = vsel %vm1198, %v1100, 0.0
        %v1215 = vsel %vm1199, %v1101, 0.0
        %v1216 = vsel %vm1200, %v1102, 0.0
        %v1217 = vsel %vm1201, %v1103, 0.0
        %v1218 = vsel %vm1202, %v1104, 0.0
        %v1219 = vsel %vm1203, %v1105, 0.0
        %v1220 = vsel %vm1204, %v1106, 0.0
        %v1221 = vsel %vm1205, %v1107, 0.0
        %v1222 = vsel %vm1206, %v1108, 0.0
        %v1223 = vsel %vm1207, %v1109, 0.0
        %v1224 = vsel %vm901, %v1208, 0.0
        %1225 = vadd.xlane.f32.xlu0 %v1224
        %v1226 = vpop.xlane.xlu0 %1225
        %v1227 = vsel %vm901, %v1209, 0.0
        %1228 = vadd.xlane.f32.xlu0 %v1227
        %v1229 = vpop.xlane.xlu0 %1228
        %v1230 = vsel %vm901, %v1210, 0.0
        %1231 = vadd.xlane.f32.xlu0 %v1230
        %v1232 = vpop.xlane.xlu0 %1231
        %v1233 = vsel %vm901, %v1211, 0.0
        %1234 = vadd.xlane.f32.xlu0 %v1233
        %v1235 = vpop.xlane.xlu0 %1234
        %v1236 = vsel %vm901, %v1212, 0.0
        %1237 = vadd.xlane.f32.xlu0 %v1236
        %v1238 = vpop.xlane.xlu0 %1237
        %v1239 = vsel %vm901, %v1213, 0.0
        %1240 = vadd.xlane.f32.xlu0 %v1239
        %v1241 = vpop.xlane.xlu0 %1240
        %v1242 = vsel %vm901, %v1214, 0.0
        %1243 = vadd.xlane.f32.xlu0 %v1242
        %v1244 = vpop.xlane.xlu0 %1243
        %v1245 = vsel %vm901, %v1215, 0.0
        %1246 = vadd.xlane.f32.xlu0 %v1245
        %v1247 = vpop.xlane.xlu0 %1246
        %v1248 = vsel %vm901, %v1216, 0.0
        %1249 = vadd.xlane.f32.xlu0 %v1248
        %v1250 = vpop.xlane.xlu0 %1249
        %v1251 = vsel %vm901, %v1217, 0.0
        %1252 = vadd.xlane.f32.xlu0 %v1251
        %v1253 = vpop.xlane.xlu0 %1252
        %v1254 = vsel %vm901, %v1218, 0.0
        %1255 = vadd.xlane.f32.xlu0 %v1254
        %v1256 = vpop.xlane.xlu0 %1255
        %v1257 = vsel %vm901, %v1219, 0.0
        %1258 = vadd.xlane.f32.xlu0 %v1257
        %v1259 = vpop.xlane.xlu0 %1258
        %v1260 = vsel %vm901, %v1220, 0.0
        %1261 = vadd.xlane.f32.xlu0 %v1260
        %v1262 = vpop.xlane.xlu0 %1261
        %v1263 = vsel %vm901, %v1221, 0.0
        %1264 = vadd.xlane.f32.xlu0 %v1263
        %v1265 = vpop.xlane.xlu0 %1264
        %v1266 = vsel %vm901, %v1222, 0.0
        %1267 = vadd.xlane.f32.xlu0 %v1266
        %v1268 = vpop.xlane.xlu0 %1267
        %v1269 = vsel %vm901, %v1223, 0.0
        %1270 = vadd.xlane.f32.xlu0 %v1269
        %v1271 = vpop.xlane.xlu0 %1270
        %v1272 = vmul.f32 %v1111, %v1094
        %v1273 = vmul.f32 %v1113, %v1095
        %v1274 = vmul.f32 %v1115, %v1096
        %v1275 = vmul.f32 %v1117, %v1097
        %v1276 = vmul.f32 %v1119, %v1098
        %v1277 = vmul.f32 %v1121, %v1099
        %v1278 = vmul.f32 %v1123, %v1100
        %v1279 = vmul.f32 %v1125, %v1101
        %v1280 = vmul.f32 %v1127, %v1102
        %v1281 = vmul.f32 %v1129, %v1103
        %v1282 = vmul.f32 %v1131, %v1104
        %v1283 = vmul.f32 %v1133, %v1105
        %v1284 = vmul.f32 %v1135, %v1106
        %v1285 = vmul.f32 %v1137, %v1107
        %v1286 = vmul.f32 %v1139, %v1108
        %v1287 = vmul.f32 %v1141, %v1109
        %v1288 = vsel %vm901, %v1272, 0.0
        %1289 = vadd.xlane.f32.xlu0 %v1288
        %v1290 = vpop.xlane.xlu0 %1289
        %v1291 = vsel %vm901, %v1273, 0.0
        %1292 = vadd.xlane.f32.xlu0 %v1291
        %v1293 = vpop.xlane.xlu0 %1292
        %v1294 = vsel %vm901, %v1274, 0.0
        %1295 = vadd.xlane.f32.xlu0 %v1294
        %v1296 = vpop.xlane.xlu0 %1295
        %v1297 = vsel %vm901, %v1275, 0.0
        %1298 = vadd.xlane.f32.xlu0 %v1297
        %v1299 = vpop.xlane.xlu0 %1298
        %v1300 = vsel %vm901, %v1276, 0.0
        %1301 = vadd.xlane.f32.xlu0 %v1300
        %v1302 = vpop.xlane.xlu0 %1301
        %v1303 = vsel %vm901, %v1277, 0.0
        %1304 = vadd.xlane.f32.xlu0 %v1303
        %v1305 = vpop.xlane.xlu0 %1304
        %v1306 = vsel %vm901, %v1278, 0.0
        %1307 = vadd.xlane.f32.xlu0 %v1306
        %v1308 = vpop.xlane.xlu0 %1307
        %v1309 = vsel %vm901, %v1279, 0.0
        %1310 = vadd.xlane.f32.xlu0 %v1309
        %v1311 = vpop.xlane.xlu0 %1310
        %v1312 = vsel %vm901, %v1280, 0.0
        %1313 = vadd.xlane.f32.xlu0 %v1312
        %v1314 = vpop.xlane.xlu0 %1313
        %v1315 = vsel %vm901, %v1281, 0.0
        %1316 = vadd.xlane.f32.xlu0 %v1315
        %v1317 = vpop.xlane.xlu0 %1316
        %v1318 = vsel %vm901, %v1282, 0.0
        %1319 = vadd.xlane.f32.xlu0 %v1318
        %v1320 = vpop.xlane.xlu0 %1319
        %v1321 = vsel %vm901, %v1283, 0.0
        %1322 = vadd.xlane.f32.xlu0 %v1321
        %v1323 = vpop.xlane.xlu0 %1322
        %v1324 = vsel %vm901, %v1284, 0.0
        %1325 = vadd.xlane.f32.xlu0 %v1324
        %v1326 = vpop.xlane.xlu0 %1325
        %v1327 = vsel %vm901, %v1285, 0.0
        %1328 = vadd.xlane.f32.xlu0 %v1327
        %v1329 = vpop.xlane.xlu0 %1328
        %v1330 = vsel %vm901, %v1286, 0.0
        %1331 = vadd.xlane.f32.xlu0 %v1330
        %v1332 = vpop.xlane.xlu0 %1331
        %v1333 = vsel %vm901, %v1287, 0.0
        %1334 = vadd.xlane.f32.xlu0 %v1333
        %v1335 = vpop.xlane.xlu0 %1334
        %v1336 = vsub.f32 0.0, %v1290
        %v1337 = vsub.f32 0.0, %v1293
        %v1338 = vsub.f32 0.0, %v1296
        %v1339 = vsub.f32 0.0, %v1299
        %v1340 = vsub.f32 0.0, %v1302
        %v1341 = vsub.f32 0.0, %v1305
        %v1342 = vsub.f32 0.0, %v1308
        %v1343 = vsub.f32 0.0, %v1311
        %v1344 = vsub.f32 0.0, %v1314
        %v1345 = vsub.f32 0.0, %v1317
        %v1346 = vsub.f32 0.0, %v1320
        %v1347 = vsub.f32 0.0, %v1323
        %v1348 = vsub.f32 0.0, %v1326
        %v1349 = vsub.f32 0.0, %v1329
        %v1350 = vsub.f32 0.0, %v1332
        %v1351 = vsub.f32 0.0, %v1335
        %vm1352 = vcmp.eq.s32.totalorder %v1143, 0
        %vm1353 = vcmp.eq.s32.totalorder %v1143, 1
        %vm1354 = vcmp.eq.s32.totalorder %v1143, 2
        %v1355 = vsel %vm1354, %v1336, 0.0
        %v1356 = vsel %vm1354, %v1337, 0.0
        %v1357 = vsel %vm1354, %v1338, 0.0
        %v1358 = vsel %vm1354, %v1339, 0.0
        %v1359 = vsel %vm1354, %v1340, 0.0
        %v1360 = vsel %vm1354, %v1341, 0.0
        %v1361 = vsel %vm1354, %v1342, 0.0
        %v1362 = vsel %vm1354, %v1343, 0.0
        %v1363 = vsel %vm1354, %v1344, 0.0
        %v1364 = vsel %vm1354, %v1345, 0.0
        %v1365 = vsel %vm1354, %v1346, 0.0
        %v1366 = vsel %vm1354, %v1347, 0.0
        %v1367 = vsel %vm1354, %v1348, 0.0
        %v1368 = vsel %vm1354, %v1349, 0.0
        %v1369 = vsel %vm1354, %v1350, 0.0
        %v1370 = vsel %vm1354, %v1351, 0.0
        %1372 = vset.pattern.permute.xlu0 8
        %1373 = vperm.xlu0 %1372, %v775
        %v1374 = vpop.permute.xlu0 %1373
        %1377 = vset.pattern.permute.xlu0 8
        %1378 = vperm.xlu0 %1377, %v780
        %v1379 = vpop.permute.xlu0 %1378
        %1382 = vset.pattern.permute.xlu0 8
        %1383 = vperm.xlu0 %1382, %v785
        %v1384 = vpop.permute.xlu0 %1383
        %1387 = vset.pattern.permute.xlu0 8
        %1388 = vperm.xlu0 %1387, %v790
        %v1389 = vpop.permute.xlu0 %1388
        %1392 = vset.pattern.permute.xlu0 8
        %1393 = vperm.xlu0 %1392, %v795
        %v1394 = vpop.permute.xlu0 %1393
        %1397 = vset.pattern.permute.xlu0 8
        %1398 = vperm.xlu0 %1397, %v800
        %v1399 = vpop.permute.xlu0 %1398
        %1402 = vset.pattern.permute.xlu0 8
        %1403 = vperm.xlu0 %1402, %v805
        %v1404 = vpop.permute.xlu0 %1403
        %1407 = vset.pattern.permute.xlu0 8
        %1408 = vperm.xlu0 %1407, %v810
        %v1409 = vpop.permute.xlu0 %1408
        %1412 = vset.pattern.permute.xlu0 8
        %1413 = vperm.xlu0 %1412, %v815
        %v1414 = vpop.permute.xlu0 %1413
        %1417 = vset.pattern.permute.xlu0 8
        %1418 = vperm.xlu0 %1417, %v820
        %v1419 = vpop.permute.xlu0 %1418
        %1422 = vset.pattern.permute.xlu0 8
        %1423 = vperm.xlu0 %1422, %v825
        %v1424 = vpop.permute.xlu0 %1423
        %1427 = vset.pattern.permute.xlu0 8
        %1428 = vperm.xlu0 %1427, %v830
        %v1429 = vpop.permute.xlu0 %1428
        %1432 = vset.pattern.permute.xlu0 8
        %1433 = vperm.xlu0 %1432, %v835
        %v1434 = vpop.permute.xlu0 %1433
        %1437 = vset.pattern.permute.xlu0 8
        %1438 = vperm.xlu0 %1437, %v840
        %v1439 = vpop.permute.xlu0 %1438
        %1442 = vset.pattern.permute.xlu0 8
        %1443 = vperm.xlu0 %1442, %v845
        %v1444 = vpop.permute.xlu0 %1443
        %1447 = vset.pattern.permute.xlu0 8
        %1448 = vperm.xlu0 %1447, %v850
        %v1449 = vpop.permute.xlu0 %1448
        %v1451 = vsel %vm1353, %v1374, %v1355
        %v1452 = vsel %vm1353, %v1379, %v1356
        %v1453 = vsel %vm1353, %v1384, %v1357
        %v1454 = vsel %vm1353, %v1389, %v1358
        %v1455 = vsel %vm1353, %v1394, %v1359
        %v1456 = vsel %vm1353, %v1399, %v1360
        %v1457 = vsel %vm1353, %v1404, %v1361
        %v1458 = vsel %vm1353, %v1409, %v1362
        %v1459 = vsel %vm1353, %v1414, %v1363
        %v1460 = vsel %vm1353, %v1419, %v1364
        %v1461 = vsel %vm1353, %v1424, %v1365
        %v1462 = vsel %vm1353, %v1429, %v1366
        %v1463 = vsel %vm1353, %v1434, %v1367
        %v1464 = vsel %vm1353, %v1439, %v1368
        %v1465 = vsel %vm1353, %v1444, %v1369
        %v1466 = vsel %vm1353, %v1449, %v1370
        %v1467 = vsel %vm1352, %v1226, %v1451
        %v1468 = vsel %vm1352, %v1229, %v1452
        %v1469 = vsel %vm1352, %v1232, %v1453
        %v1470 = vsel %vm1352, %v1235, %v1454
        %v1471 = vsel %vm1352, %v1238, %v1455
        %v1472 = vsel %vm1352, %v1241, %v1456
        %v1473 = vsel %vm1352, %v1244, %v1457
        %v1474 = vsel %vm1352, %v1247, %v1458
        %v1475 = vsel %vm1352, %v1250, %v1459
        %v1476 = vsel %vm1352, %v1253, %v1460
        %v1477 = vsel %vm1352, %v1256, %v1461
        %v1478 = vsel %vm1352, %v1259, %v1462
        %v1479 = vsel %vm1352, %v1262, %v1463
        %v1480 = vsel %vm1352, %v1265, %v1464
        %v1481 = vsel %vm1352, %v1268, %v1465
        %v1482 = vsel %vm1352, %v1271, %v1466
        %1483 = vxpose.xlu0.b32.start [1/16] %v1467, 128
        %1484 = vxpose.xlu0.b32.cont [2/16] %v1468, 128
        %1485 = vxpose.xlu0.b32.cont [3/16] %v1469, 128
        %1486 = vxpose.xlu0.b32.cont [4/16] %v1470, 128
        %1487 = vxpose.xlu0.b32.cont [5/16] %v1471, 128
        %1488 = vxpose.xlu0.b32.cont [6/16] %v1472, 128
        %1489 = vxpose.xlu0.b32.cont [7/16] %v1473, 128
        %1490 = vxpose.xlu0.b32.cont [8/16] %v1474, 128
        %1491 = vxpose.xlu0.b32.cont [9/16] %v1475, 128
        %1492 = vxpose.xlu0.b32.cont [10/16] %v1476, 128
        %1493 = vxpose.xlu0.b32.cont [11/16] %v1477, 128
        %1494 = vxpose.xlu0.b32.cont [12/16] %v1478, 128
        %1495 = vxpose.xlu0.b32.cont [13/16] %v1479, 128
        %1496 = vxpose.xlu0.b32.cont [14/16] %v1480, 128
        %1497 = vxpose.xlu0.b32.cont [15/16] %v1481, 128
        %1498 = vxpose.xlu0.b32.end [16/16] %v1482, 128
        %v1499 = vpop.trf.xlu0
        %v1500 = vpop.trf.xlu0
        %v1501 = vpop.trf.xlu0
        %v1502 = vpop.trf.xlu0
        %v1503 = vpop.trf.xlu0
        %v1504 = vpop.trf.xlu0
        %v1505 = vpop.trf.xlu0
        %v1506 = vpop.trf.xlu0
        %v1507 = vpop.trf.xlu0
        %v1508 = vpop.trf.xlu0
        %v1509 = vpop.trf.xlu0
        %v1510 = vpop.trf.xlu0
        %v1511 = vpop.trf.xlu0
        %v1512 = vpop.trf.xlu0
        %v1513 = vpop.trf.xlu0
        %v1514 = vpop.trf.xlu0
        %1515 = vst [vmem:[%s218] sm:$0xff] %v1499
        %s1516 = sand.u32 %s137, 1
        %s1517 = scalar_lea.sflag [#allocation3], %s1516
        %s1518 = sand.u32 %s137, 1
        %s1519 = smul.addr %s1518, 8
        %s1520 = scalar_lea.vmem [#allocation2], %s1519
        // Predicated region
        $region41: #{tpu_custom_call.1} parent=39 // pred_check
          %p1521 = pneg %p147
        $region42: #{tpu_custom_call.1} parent=39 // pred_check_branch
          %1523 = sbr.rel (%p1521) target = $region44
        $region43: #{tpu_custom_call.1} parent=39 // pred_region
          %s1525 = ssub.s32 128, 128
          %1526 = vsyncadd %s1517, %s1525
          %s1527 = smul.addr %s19, 128
          %s1528 = scalar_lea.hbm %s5, %s1527
          %s1530 = sshll.u32 %s1520, 4
          %s1531 = int_to_ptr.vmem [resolvable:$true] %s1530
          %1533 = dma.vmem_to_hbm [thread:$0]  %s1531, 128, %s1528, %s1517
        $region44: #{tpu_custom_call.1} parent=39 // pred_fallthru
          _
      $region40: #{tpu_custom_call.1} parent=5 // pred_fallthru
        _
      %p1534 = scmp.le.s32.totalorder 2, %s14
      // Predicated region
      $region45: #{tpu_custom_call.1} parent=5 // pred_check
        %p1535 = pneg %p1534
      $region46: #{tpu_custom_call.1} parent=5 // pred_check_branch
        %1537 = sbr.rel (%p1535) target = $region48
      $region47: #{tpu_custom_call.1} parent=5 // pred_region
        %s1538 = ssub.s32 %s14, 2
        // Predicated region
        $region49: #{tpu_custom_call.1} parent=47 // pred_check
          %p1539 = pneg %p153
        $region50: #{tpu_custom_call.1} parent=47 // pred_check_branch
          %1541 = sbr.rel (%p1539) target = $region52
        $region51: #{tpu_custom_call.1} parent=47 // pred_region
          %s1542 = sand.u32 %s138, 1
          %s1543 = scalar_lea.sflag [#allocation3], %s1542
          %s1544 = sand.u32 %s138, 1
          %s1545 = smul.addr %s1544, 8
          %s1546 = scalar_lea.vmem [#allocation2], %s1545
          %1547 = dma.done %s1543, 128
        $region52: #{tpu_custom_call.1} parent=47 // pred_fallthru
          _
      $region48: #{tpu_custom_call.1} parent=5 // pred_fallthru
        _
    $region6: #{tpu_custom_call.1} parent=1 // loop_footer
      %s18 = sadd.s32 1, %s14
    $region7: #{tpu_custom_call.1} parent=1 // loop_footer_branch
      %13 = sbr.rel target = $region3
    $region8: #{tpu_custom_call.1} parent=1 // loop_exit
      _
    %1548 = vsyncpa [#allocation3], 1
    %s1549 = scalar_lea.sflag [#allocation3], 1
    %1550 = vsyncpa %s1549, 1

</llo_original>
